<compile_context>
chip_gen: v7x
topology: tpu7x:2x2x1
jax: 0.10.0
libtpu: 0.0.40
codegen_flags: <defaults>
</compile_context>

<pallas_src>
import functools
import math

import jax
import jax.numpy as jnp
from jax import lax
from jax.experimental import pallas as pl
from jax.experimental.pallas import tpu as pltpu


def block_kernel(x_ref, g1_ref, b1_ref, wqkv_ref, wproj_ref, bproj_ref,
                 g2_ref, b2_ref, wfc1_ref, bfc1_ref, wfc2_ref, bfc2_ref,
                 o_ref, *, num_heads, head_dim, eps, approx_gelu):
    """One grid step == `batch_block` batch elements, fully resident in VMEM."""
    BB, N, C = x_ref.shape
    rows = BB * N
    f32 = jnp.float32
    mm_dtype = wqkv_ref.dtype          # matmul compute dtype (f32 or bf16)

    def mm(a, b, dims=None):
        # MXU matmul in mm_dtype with f32 accumulation.
        a = a.astype(mm_dtype)
        b = b.astype(mm_dtype)
        if dims is None:
            return jnp.dot(a, b, preferred_element_type=f32)
        return lax.dot_general(a, b, dims, preferred_element_type=f32)

    # ---- LayerNorm 1 (stats in f32) over the flattened (rows, C) block ----
    x = x_ref[...].reshape(rows, C).astype(f32)      # merge leading dims: free
    mu = jnp.mean(x, axis=-1, keepdims=True)
    var = jnp.mean(jnp.square(x - mu), axis=-1, keepdims=True)
    xn = (x - mu) * lax.rsqrt(var + eps) * g1_ref[...] + b1_ref[...]

    # ---- Attention (qkv_bias=False; softmax scale pre-folded into Q cols) ----
    qkv = mm(xn, wqkv_ref[...])                      # (rows, 3C) f32
    qkv3 = qkv.reshape(BB, N, 3 * C)                 # split leading dim: free

    qk_dims = (((2,), (2,)), ((0,), (0,)))           # q·k over Dh, batched on BB
    pv_dims = (((2,), (1,)), ((0,), (0,)))           # p·v over keys, batched on BB

    proj_acc = jnp.zeros((rows, C), f32)
    for h in range(num_heads):                       # static unroll over heads
        lo = h * head_dim
        q = qkv3[:, :, lo:lo + head_dim]                         # (BB, N, Dh)
        k = qkv3[:, :, C + lo:C + lo + head_dim]                 # (BB, N, Dh)
        v = qkv3[:, :, 2 * C + lo:2 * C + lo + head_dim]         # (BB, N, Dh)
        s = mm(q, k, qk_dims)                                    # (BB, N, N)
        s = s - jnp.max(s, axis=-1, keepdims=True)
        p = jnp.exp(s)
        p = p * pl.reciprocal(jnp.sum(p, axis=-1, keepdims=True), approx=True)
        ho = mm(p, v, pv_dims)                                   # (BB, N, Dh)
        # Consume the head immediately: accumulate through the matching
        # sublane slice of wproj (no concat, no per-head live outputs).
        proj_acc = proj_acc + mm(ho.reshape(rows, head_dim),
                                 wproj_ref[lo:lo + head_dim, :])
    x1 = x + proj_acc + bproj_ref[...]               # residual 1

    # ---- LayerNorm 2 ----
    mu2 = jnp.mean(x1, axis=-1, keepdims=True)
    var2 = jnp.mean(jnp.square(x1 - mu2), axis=-1, keepdims=True)
    x2n = (x1 - mu2) * lax.rsqrt(var2 + eps) * g2_ref[...] + b2_ref[...]

    # ---- MLP: fc1 -> GELU -> fc2 ----
    h1 = mm(x2n, wfc1_ref[...]) + bfc1_ref[...]
    if approx_gelu:
        # tanh-approximate GELU (cheaper EUP path; slight deviation from
        # PyTorch's default exact-erf nn.GELU — gated behind this flag).
        c = math.sqrt(2.0 / math.pi)
        h1 = 0.5 * h1 * (1.0 + jnp.tanh(c * (h1 + 0.044715 * h1 * h1 * h1)))
    else:
        h1 = 0.5 * h1 * (1.0 + lax.erf(h1 * 0.7071067811865476))  # exact GELU
    h2 = mm(h1, wfc2_ref[...]) + bfc2_ref[...]

    o_ref[...] = (x1 + h2).reshape(BB, N, C).astype(o_ref.dtype)  # residual 2


def prepare_block_params(p, *, num_heads, matmul_dtype=jnp.float32):
    """One-time parameter prep: fold the softmax scale (head_dim**-0.5) into
    the Q columns of the QKV weight and cast matmul weights to `matmul_dtype`.
    LayerNorm params and biases stay f32."""
    C = p["wproj"].shape[0]
    scale = (C // num_heads) ** -0.5
    q = dict(p)
    q["wqkv"] = p["wqkv"].at[:, :C].multiply(scale).astype(matmul_dtype)
    q["wproj"] = p["wproj"].astype(matmul_dtype)
    q["wfc1"] = p["wfc1"].astype(matmul_dtype)
    q["wfc2"] = p["wfc2"].astype(matmul_dtype)
    return q


def _pick_batch_block(B, N, target_rows=256):
    """Batch elements per grid step: aim for ~256 rows to feed the MXU while
    keeping >= 2 grid steps when possible (both v7x TensorCores get work)."""
    divisors = [bb for bb in range(1, B + 1) if B % bb == 0]
    good = [bb for bb in divisors if B // bb >= 2 and bb * N <= target_rows]
    if good:
        return max(good)
    ok = [bb for bb in divisors if bb * N <= target_rows]
    return max(ok) if ok else 1


def block_forward(x, p, *, num_heads, approx_gelu=False, batch_block=None,
                  eps=1e-5):
    """x: (B, N, C) activations; p: params from prepare_block_params."""
    B, N, C = x.shape
    head_dim = C // num_heads
    hidden = p["wfc1"].shape[1]
    if batch_block is None:
        batch_block = _pick_batch_block(B, N)
    assert B % batch_block == 0

    kernel = functools.partial(
        block_kernel, num_heads=num_heads, head_dim=head_dim, eps=eps,
        approx_gelu=approx_gelu)

    def full(shape):
        return pl.BlockSpec(shape, lambda b, _n=len(shape): (0,) * _n)

    in_specs = [
        pl.BlockSpec((batch_block, N, C), lambda b: (b, 0, 0)),  # x row block
        full((1, C)), full((1, C)),                   # norm1 gamma / beta
        full((C, 3 * C)),                             # qkv weight (scale folded)
        full((C, C)), full((1, C)),                   # proj weight / bias
        full((1, C)), full((1, C)),                   # norm2 gamma / beta
        full((C, hidden)), full((1, hidden)),         # fc1 weight / bias
        full((hidden, C)), full((1, C)),              # fc2 weight / bias
    ]
    return pl.pallas_call(
        kernel,
        out_shape=jax.ShapeDtypeStruct((B, N, C), x.dtype),
        grid=(B // batch_block,),
        in_specs=in_specs,
        out_specs=pl.BlockSpec((batch_block, N, C), lambda b: (b, 0, 0)),
        compiler_params=pltpu.CompilerParams(dimension_semantics=("parallel",)),
    )(x, p["g1"], p["b1"], p["wqkv"], p["wproj"], p["bproj"],
      p["g2"], p["b2"], p["wfc1"], p["bfc1"], p["wfc2"], p["bfc2"])


def block_reference(x, p, num_heads):
    """Pure-JAX reference mirroring the PyTorch forward (unscaled raw params)."""
    def ln(y, g, b):
        mu = y.mean(-1, keepdims=True)
        var = ((y - mu) ** 2).mean(-1, keepdims=True)
        return (y - mu) / jnp.sqrt(var + 1e-5) * g + b

    B, N, C = x.shape
    Dh = C // num_heads
    xn = ln(x, p["g1"][0], p["b1"][0])
    qkv = (xn @ p["wqkv"]).reshape(B, N, 3, num_heads, Dh).transpose(2, 0, 3, 1, 4)
    q, k, v = qkv[0], qkv[1], qkv[2]
    attn = jnp.einsum("bhqd,bhkd->bhqk", q, k) * (Dh ** -0.5)
    attn = jax.nn.softmax(attn, axis=-1)
    ao = jnp.einsum("bhqk,bhkd->bhqd", attn, v).transpose(0, 2, 1, 3).reshape(B, N, C)
    x1 = x + ao @ p["wproj"] + p["bproj"][0]
    x2n = ln(x1, p["g2"][0], p["b2"][0])
    h = jax.nn.gelu(x2n @ p["wfc1"] + p["bfc1"][0], approximate=False)
    return x1 + h @ p["wfc2"] + p["bfc2"][0]


if __name__ == "__main__":
    # Small, module-consistent shapes: B=4 sequences, N=8 tokens, C=32 channels,
    # num_heads=4 (head_dim=8), mlp_ratio=4 -> hidden=128.
    B, N, C, H = 4, 8, 32, 4
    hidden = int(C * 4.0)
    key = jax.random.PRNGKey(0)
    ks = jax.random.split(key, 8)

    params = {
        "g1":    jnp.ones((1, C), jnp.float32),
        "b1":    jnp.zeros((1, C), jnp.float32),
        "wqkv":  0.05 * jax.random.normal(ks[0], (C, 3 * C), jnp.float32),
        "wproj": 0.05 * jax.random.normal(ks[1], (C, C), jnp.float32),
        "bproj": 0.05 * jax.random.normal(ks[2], (1, C), jnp.float32),
        "g2":    jnp.ones((1, C), jnp.float32),
        "b2":    jnp.zeros((1, C), jnp.float32),
        "wfc1":  0.05 * jax.random.normal(ks[3], (C, hidden), jnp.float32),
        "bfc1":  0.05 * jax.random.normal(ks[4], (1, hidden), jnp.float32),
        "wfc2":  0.05 * jax.random.normal(ks[5], (hidden, C), jnp.float32),
        "bfc2":  0.05 * jax.random.normal(ks[6], (1, C), jnp.float32),
    }
    x = jax.random.normal(ks[7], (B, N, C), jnp.float32)

    ref = block_reference(x, params, H)

    # Exact path: f32 matmuls (default).
    p_f32 = prepare_block_params(params, num_heads=H, matmul_dtype=jnp.float32)
    out = jax.block_until_ready(block_forward(x, p_f32, num_heads=H))
    assert out.shape == (B, N, C)
    assert jnp.allclose(out, ref, atol=2e-3, rtol=2e-3), (
        float(jnp.max(jnp.abs(out - ref))))

    # Fast path: bf16 matmuls with f32 accumulation (v6e/v7x MXU rate,
    # halves weight bytes); looser tolerance vs the f32 reference.
    p_bf16 = prepare_block_params(params, num_heads=H, matmul_dtype=jnp.bfloat16)
    out_bf16 = jax.block_until_ready(block_forward(x, p_bf16, num_heads=H))
    assert jnp.allclose(out_bf16, ref, atol=8e-2, rtol=8e-2), (
        float(jnp.max(jnp.abs(out_bf16 - ref))))

    print("KERNEL_OK")
</pallas_src>

<mosaic_0001>
module attributes {stable_mosaic.version = 11 : i64} {
  func.func @block_kernel(%arg0: i32, %arg1: memref<2x8x32xf32, #tpu.memory_space<vmem>>, %arg2: memref<1x32xf32, #tpu.memory_space<vmem>>, %arg3: memref<1x32xf32, #tpu.memory_space<vmem>>, %arg4: memref<32x96xf32, #tpu.memory_space<vmem>>, %arg5: memref<32x32xf32, #tpu.memory_space<vmem>>, %arg6: memref<1x32xf32, #tpu.memory_space<vmem>>, %arg7: memref<1x32xf32, #tpu.memory_space<vmem>>, %arg8: memref<1x32xf32, #tpu.memory_space<vmem>>, %arg9: memref<32x128xf32, #tpu.memory_space<vmem>>, %arg10: memref<1x128xf32, #tpu.memory_space<vmem>>, %arg11: memref<128x32xf32, #tpu.memory_space<vmem>>, %arg12: memref<1x32xf32, #tpu.memory_space<vmem>>, %arg13: memref<2x8x32xf32, #tpu.memory_space<vmem>>) attributes {dimension_semantics = [#tpu.dimension_semantics<parallel>], iteration_bounds = array<i64: 2>, scalar_prefetch = 0 : i64, scratch_operands = 0 : i64, tpu.core_type = #tpu.core_type<tc>, window_params = [{transform_indices = @transform_0, window_bounds = array<i64: 2, 8, 32>}, {pipeline_mode = #tpu.pipeline_mode<synchronous>, transform_indices = @transform_1, window_bounds = array<i64: 1, 32>}, {pipeline_mode = #tpu.pipeline_mode<synchronous>, transform_indices = @transform_2, window_bounds = array<i64: 1, 32>}, {pipeline_mode = #tpu.pipeline_mode<synchronous>, transform_indices = @transform_3, window_bounds = array<i64: 32, 96>}, {pipeline_mode = #tpu.pipeline_mode<synchronous>, transform_indices = @transform_4, window_bounds = array<i64: 32, 32>}, {pipeline_mode = #tpu.pipeline_mode<synchronous>, transform_indices = @transform_5, window_bounds = array<i64: 1, 32>}, {pipeline_mode = #tpu.pipeline_mode<synchronous>, transform_indices = @transform_6, window_bounds = array<i64: 1, 32>}, {pipeline_mode = #tpu.pipeline_mode<synchronous>, transform_indices = @transform_7, window_bounds = array<i64: 1, 32>}, {pipeline_mode = #tpu.pipeline_mode<synchronous>, transform_indices = @transform_8, window_bounds = array<i64: 32, 128>}, {pipeline_mode = #tpu.pipeline_mode<synchronous>, transform_indices = @transform_9, window_bounds = array<i64: 1, 128>}, {pipeline_mode = #tpu.pipeline_mode<synchronous>, transform_indices = @transform_10, window_bounds = array<i64: 128, 32>}, {pipeline_mode = #tpu.pipeline_mode<synchronous>, transform_indices = @transform_11, window_bounds = array<i64: 1, 32>}, {transform_indices = @transform_12, window_bounds = array<i64: 2, 8, 32>}]} {
    %c0 = arith.constant 0 : index
    %c0_0 = arith.constant 0 : index
    %c0_1 = arith.constant 0 : index
    %0 = vector.load %arg1[%c0, %c0_0, %c0_1] : memref<2x8x32xf32, #tpu.memory_space<vmem>>, vector<2x8x32xf32>
    %1 = vector.shape_cast %0 : vector<2x8x32xf32> to vector<16x32xf32>
    %cst = arith.constant dense<0.000000e+00> : vector<16xf32>
    %2 = vector.multi_reduction <add>, %1, %cst [1] : vector<16x32xf32> to vector<16xf32>
    %3 = vector.shape_cast %2 : vector<16xf32> to vector<16x1xf32>
    %cst_2 = arith.constant 3.200000e+01 : f32
    %4 = vector.broadcast %cst_2 : f32 to vector<16x1xf32>
    %5 = arith.divf %3, %4 : vector<16x1xf32>
    %6 = vector.broadcast %5 : vector<16x1xf32> to vector<16x32xf32>
    %7 = arith.subf %1, %6 : vector<16x32xf32>
    %8 = arith.mulf %7, %7 : vector<16x32xf32>
    %cst_3 = arith.constant dense<0.000000e+00> : vector<16xf32>
    %9 = vector.multi_reduction <add>, %8, %cst_3 [1] : vector<16x32xf32> to vector<16xf32>
    %10 = vector.shape_cast %9 : vector<16xf32> to vector<16x1xf32>
    %cst_4 = arith.constant 3.200000e+01 : f32
    %11 = vector.broadcast %cst_4 : f32 to vector<16x1xf32>
    %12 = arith.divf %10, %11 : vector<16x1xf32>
    %13 = vector.broadcast %5 : vector<16x1xf32> to vector<16x32xf32>
    %14 = arith.subf %1, %13 : vector<16x32xf32>
    %cst_5 = arith.constant 9.99999974E-6 : f32
    %15 = vector.broadcast %cst_5 : f32 to vector<16x1xf32>
    %16 = arith.addf %12, %15 : vector<16x1xf32>
    %17 = math.rsqrt %16 : vector<16x1xf32>
    %18 = vector.broadcast %17 : vector<16x1xf32> to vector<16x32xf32>
    %19 = arith.mulf %14, %18 : vector<16x32xf32>
    %c0_6 = arith.constant 0 : index
    %c0_7 = arith.constant 0 : index
    %20 = vector.load %arg2[%c0_6, %c0_7] : memref<1x32xf32, #tpu.memory_space<vmem>>, vector<1x32xf32>
    %21 = vector.broadcast %20 : vector<1x32xf32> to vector<16x32xf32>
    %22 = arith.mulf %19, %21 : vector<16x32xf32>
    %c0_8 = arith.constant 0 : index
    %c0_9 = arith.constant 0 : index
    %23 = vector.load %arg3[%c0_8, %c0_9] : memref<1x32xf32, #tpu.memory_space<vmem>>, vector<1x32xf32>
    %24 = vector.broadcast %23 : vector<1x32xf32> to vector<16x32xf32>
    %25 = arith.addf %22, %24 : vector<16x32xf32>
    %c0_10 = arith.constant 0 : index
    %c0_11 = arith.constant 0 : index
    %26 = vector.load %arg4[%c0_10, %c0_11] : memref<32x96xf32, #tpu.memory_space<vmem>>, vector<32x96xf32>
    %cst_12 = arith.constant dense<0.000000e+00> : vector<16x96xf32>
    %27 = tpu.matmul %25, %26, %cst_12 {dimension_numbers = #tpu.dot_dimension_numbers<[1], [0], [0], [1], [0, 0, 1, 1], [], []>} : vector<16x32xf32>, vector<32x96xf32>, vector<16x96xf32> -> vector<16x96xf32>
    %28 = vector.shape_cast %27 : vector<16x96xf32> to vector<2x8x96xf32>
    %cst_13 = arith.constant 0.000000e+00 : f32
    %29 = vector.broadcast %cst_13 : f32 to vector<16x32xf32>
    %30 = vector.extract_strided_slice %28 {offsets = [0, 0, 0], sizes = [2, 8, 8], strides = [1, 1, 1]} : vector<2x8x96xf32> to vector<2x8x8xf32>
    %31 = vector.extract_strided_slice %28 {offsets = [0, 0, 32], sizes = [2, 8, 8], strides = [1, 1, 1]} : vector<2x8x96xf32> to vector<2x8x8xf32>
    %32 = vector.extract_strided_slice %28 {offsets = [0, 0, 64], sizes = [2, 8, 8], strides = [1, 1, 1]} : vector<2x8x96xf32> to vector<2x8x8xf32>
    %cst_14 = arith.constant dense<0.000000e+00> : vector<2x8x8xf32>
    %33 = tpu.matmul %30, %31, %cst_14 {dimension_numbers = #tpu.dot_dimension_numbers<[2], [2], [1], [1], [0, 0, 0, 1, 1, 1], [0], [0]>} : vector<2x8x8xf32>, vector<2x8x8xf32>, vector<2x8x8xf32> -> vector<2x8x8xf32>
    %cst_15 = arith.constant dense<0xFF800000> : vector<2x8xf32>
    %34 = vector.multi_reduction <maximumf>, %33, %cst_15 [2] : vector<2x8x8xf32> to vector<2x8xf32>
    %35 = vector.shape_cast %34 : vector<2x8xf32> to vector<2x8x1xf32>
    %36 = vector.broadcast %35 : vector<2x8x1xf32> to vector<2x8x8xf32>
    %37 = arith.subf %33, %36 : vector<2x8x8xf32>
    %38 = math.exp %37 : vector<2x8x8xf32>
    %cst_16 = arith.constant dense<0.000000e+00> : vector<2x8xf32>
    %39 = vector.multi_reduction <add>, %38, %cst_16 [2] : vector<2x8x8xf32> to vector<2x8xf32>
    %40 = vector.shape_cast %39 : vector<2x8xf32> to vector<2x8x1xf32>
    %41 = tpu.reciprocal %40 {approx = true} : vector<2x8x1xf32> -> vector<2x8x1xf32>
    %42 = vector.broadcast %41 : vector<2x8x1xf32> to vector<2x8x8xf32>
    %43 = arith.mulf %38, %42 : vector<2x8x8xf32>
    %cst_17 = arith.constant dense<0.000000e+00> : vector<2x8x8xf32>
    %44 = tpu.matmul %43, %32, %cst_17 {dimension_numbers = #tpu.dot_dimension_numbers<[2], [1], [1], [2], [0, 0, 0, 1, 1, 2], [0], [0]>} : vector<2x8x8xf32>, vector<2x8x8xf32>, vector<2x8x8xf32> -> vector<2x8x8xf32>
    %45 = vector.shape_cast %44 : vector<2x8x8xf32> to vector<16x8xf32>
    %c0_18 = arith.constant 0 : index
    %c0_19 = arith.constant 0 : index
    %46 = vector.load %arg5[%c0_18, %c0_19] : memref<32x32xf32, #tpu.memory_space<vmem>>, vector<8x32xf32>
    %cst_20 = arith.constant dense<0.000000e+00> : vector<16x32xf32>
    %47 = tpu.matmul %45, %46, %cst_20 {dimension_numbers = #tpu.dot_dimension_numbers<[1], [0], [0], [1], [0, 0, 1, 1], [], []>} : vector<16x8xf32>, vector<8x32xf32>, vector<16x32xf32> -> vector<16x32xf32>
    %48 = arith.addf %29, %47 : vector<16x32xf32>
    %49 = vector.extract_strided_slice %28 {offsets = [0, 0, 8], sizes = [2, 8, 8], strides = [1, 1, 1]} : vector<2x8x96xf32> to vector<2x8x8xf32>
    %50 = vector.extract_strided_slice %28 {offsets = [0, 0, 40], sizes = [2, 8, 8], strides = [1, 1, 1]} : vector<2x8x96xf32> to vector<2x8x8xf32>
    %51 = vector.extract_strided_slice %28 {offsets = [0, 0, 72], sizes = [2, 8, 8], strides = [1, 1, 1]} : vector<2x8x96xf32> to vector<2x8x8xf32>
    %cst_21 = arith.constant dense<0.000000e+00> : vector<2x8x8xf32>
    %52 = tpu.matmul %49, %50, %cst_21 {dimension_numbers = #tpu.dot_dimension_numbers<[2], [2], [1], [1], [0, 0, 0, 1, 1, 1], [0], [0]>} : vector<2x8x8xf32>, vector<2x8x8xf32>, vector<2x8x8xf32> -> vector<2x8x8xf32>
    %cst_22 = arith.constant dense<0xFF800000> : vector<2x8xf32>
    %53 = vector.multi_reduction <maximumf>, %52, %cst_22 [2] : vector<2x8x8xf32> to vector<2x8xf32>
    %54 = vector.shape_cast %53 : vector<2x8xf32> to vector<2x8x1xf32>
    %55 = vector.broadcast %54 : vector<2x8x1xf32> to vector<2x8x8xf32>
    %56 = arith.subf %52, %55 : vector<2x8x8xf32>
    %57 = math.exp %56 : vector<2x8x8xf32>
    %cst_23 = arith.constant dense<0.000000e+00> : vector<2x8xf32>
    %58 = vector.multi_reduction <add>, %57, %cst_23 [2] : vector<2x8x8xf32> to vector<2x8xf32>
    %59 = vector.shape_cast %58 : vector<2x8xf32> to vector<2x8x1xf32>
    %60 = tpu.reciprocal %59 {approx = true} : vector<2x8x1xf32> -> vector<2x8x1xf32>
    %61 = vector.broadcast %60 : vector<2x8x1xf32> to vector<2x8x8xf32>
    %62 = arith.mulf %57, %61 : vector<2x8x8xf32>
    %cst_24 = arith.constant dense<0.000000e+00> : vector<2x8x8xf32>
    %63 = tpu.matmul %62, %51, %cst_24 {dimension_numbers = #tpu.dot_dimension_numbers<[2], [1], [1], [2], [0, 0, 0, 1, 1, 2], [0], [0]>} : vector<2x8x8xf32>, vector<2x8x8xf32>, vector<2x8x8xf32> -> vector<2x8x8xf32>
    %64 = vector.shape_cast %63 : vector<2x8x8xf32> to vector<16x8xf32>
    %c8 = arith.constant 8 : index
    %c0_25 = arith.constant 0 : index
    %65 = vector.load %arg5[%c8, %c0_25] : memref<32x32xf32, #tpu.memory_space<vmem>>, vector<8x32xf32>
    %cst_26 = arith.constant dense<0.000000e+00> : vector<16x32xf32>
    %66 = tpu.matmul %64, %65, %cst_26 {dimension_numbers = #tpu.dot_dimension_numbers<[1], [0], [0], [1], [0, 0, 1, 1], [], []>} : vector<16x8xf32>, vector<8x32xf32>, vector<16x32xf32> -> vector<16x32xf32>
    %67 = arith.addf %48, %66 : vector<16x32xf32>
    %68 = vector.extract_strided_slice %28 {offsets = [0, 0, 16], sizes = [2, 8, 8], strides = [1, 1, 1]} : vector<2x8x96xf32> to vector<2x8x8xf32>
    %69 = vector.extract_strided_slice %28 {offsets = [0, 0, 48], sizes = [2, 8, 8], strides = [1, 1, 1]} : vector<2x8x96xf32> to vector<2x8x8xf32>
    %70 = vector.extract_strided_slice %28 {offsets = [0, 0, 80], sizes = [2, 8, 8], strides = [1, 1, 1]} : vector<2x8x96xf32> to vector<2x8x8xf32>
    %cst_27 = arith.constant dense<0.000000e+00> : vector<2x8x8xf32>
    %71 = tpu.matmul %68, %69, %cst_27 {dimension_numbers = #tpu.dot_dimension_numbers<[2], [2], [1], [1], [0, 0, 0, 1, 1, 1], [0], [0]>} : vector<2x8x8xf32>, vector<2x8x8xf32>, vector<2x8x8xf32> -> vector<2x8x8xf32>
    %cst_28 = arith.constant dense<0xFF800000> : vector<2x8xf32>
    %72 = vector.multi_reduction <maximumf>, %71, %cst_28 [2] : vector<2x8x8xf32> to vector<2x8xf32>
    %73 = vector.shape_cast %72 : vector<2x8xf32> to vector<2x8x1xf32>
    %74 = vector.broadcast %73 : vector<2x8x1xf32> to vector<2x8x8xf32>
    %75 = arith.subf %71, %74 : vector<2x8x8xf32>
    %76 = math.exp %75 : vector<2x8x8xf32>
    %cst_29 = arith.constant dense<0.000000e+00> : vector<2x8xf32>
    %77 = vector.multi_reduction <add>, %76, %cst_29 [2] : vector<2x8x8xf32> to vector<2x8xf32>
    %78 = vector.shape_cast %77 : vector<2x8xf32> to vector<2x8x1xf32>
    %79 = tpu.reciprocal %78 {approx = true} : vector<2x8x1xf32> -> vector<2x8x1xf32>
    %80 = vector.broadcast %79 : vector<2x8x1xf32> to vector<2x8x8xf32>
    %81 = arith.mulf %76, %80 : vector<2x8x8xf32>
    %cst_30 = arith.constant dense<0.000000e+00> : vector<2x8x8xf32>
    %82 = tpu.matmul %81, %70, %cst_30 {dimension_numbers = #tpu.dot_dimension_numbers<[2], [1], [1], [2], [0, 0, 0, 1, 1, 2], [0], [0]>} : vector<2x8x8xf32>, vector<2x8x8xf32>, vector<2x8x8xf32> -> vector<2x8x8xf32>
    %83 = vector.shape_cast %82 : vector<2x8x8xf32> to vector<16x8xf32>
    %c16 = arith.constant 16 : index
    %c0_31 = arith.constant 0 : index
    %84 = vector.load %arg5[%c16, %c0_31] : memref<32x32xf32, #tpu.memory_space<vmem>>, vector<8x32xf32>
    %cst_32 = arith.constant dense<0.000000e+00> : vector<16x32xf32>
    %85 = tpu.matmul %83, %84, %cst_32 {dimension_numbers = #tpu.dot_dimension_numbers<[1], [0], [0], [1], [0, 0, 1, 1], [], []>} : vector<16x8xf32>, vector<8x32xf32>, vector<16x32xf32> -> vector<16x32xf32>
    %86 = arith.addf %67, %85 : vector<16x32xf32>
    %87 = vector.extract_strided_slice %28 {offsets = [0, 0, 24], sizes = [2, 8, 8], strides = [1, 1, 1]} : vector<2x8x96xf32> to vector<2x8x8xf32>
    %88 = vector.extract_strided_slice %28 {offsets = [0, 0, 56], sizes = [2, 8, 8], strides = [1, 1, 1]} : vector<2x8x96xf32> to vector<2x8x8xf32>
    %89 = vector.extract_strided_slice %28 {offsets = [0, 0, 88], sizes = [2, 8, 8], strides = [1, 1, 1]} : vector<2x8x96xf32> to vector<2x8x8xf32>
    %cst_33 = arith.constant dense<0.000000e+00> : vector<2x8x8xf32>
    %90 = tpu.matmul %87, %88, %cst_33 {dimension_numbers = #tpu.dot_dimension_numbers<[2], [2], [1], [1], [0, 0, 0, 1, 1, 1], [0], [0]>} : vector<2x8x8xf32>, vector<2x8x8xf32>, vector<2x8x8xf32> -> vector<2x8x8xf32>
    %cst_34 = arith.constant dense<0xFF800000> : vector<2x8xf32>
    %91 = vector.multi_reduction <maximumf>, %90, %cst_34 [2] : vector<2x8x8xf32> to vector<2x8xf32>
    %92 = vector.shape_cast %91 : vector<2x8xf32> to vector<2x8x1xf32>
    %93 = vector.broadcast %92 : vector<2x8x1xf32> to vector<2x8x8xf32>
    %94 = arith.subf %90, %93 : vector<2x8x8xf32>
    %95 = math.exp %94 : vector<2x8x8xf32>
    %cst_35 = arith.constant dense<0.000000e+00> : vector<2x8xf32>
    %96 = vector.multi_reduction <add>, %95, %cst_35 [2] : vector<2x8x8xf32> to vector<2x8xf32>
    %97 = vector.shape_cast %96 : vector<2x8xf32> to vector<2x8x1xf32>
    %98 = tpu.reciprocal %97 {approx = true} : vector<2x8x1xf32> -> vector<2x8x1xf32>
    %99 = vector.broadcast %98 : vector<2x8x1xf32> to vector<2x8x8xf32>
    %100 = arith.mulf %95, %99 : vector<2x8x8xf32>
    %cst_36 = arith.constant dense<0.000000e+00> : vector<2x8x8xf32>
    %101 = tpu.matmul %100, %89, %cst_36 {dimension_numbers = #tpu.dot_dimension_numbers<[2], [1], [1], [2], [0, 0, 0, 1, 1, 2], [0], [0]>} : vector<2x8x8xf32>, vector<2x8x8xf32>, vector<2x8x8xf32> -> vector<2x8x8xf32>
    %102 = vector.shape_cast %101 : vector<2x8x8xf32> to vector<16x8xf32>
    %c24 = arith.constant 24 : index
    %c0_37 = arith.constant 0 : index
    %103 = vector.load %arg5[%c24, %c0_37] : memref<32x32xf32, #tpu.memory_space<vmem>>, vector<8x32xf32>
    %cst_38 = arith.constant dense<0.000000e+00> : vector<16x32xf32>
    %104 = tpu.matmul %102, %103, %cst_38 {dimension_numbers = #tpu.dot_dimension_numbers<[1], [0], [0], [1], [0, 0, 1, 1], [], []>} : vector<16x8xf32>, vector<8x32xf32>, vector<16x32xf32> -> vector<16x32xf32>
    %105 = arith.addf %86, %104 : vector<16x32xf32>
    %106 = arith.addf %1, %105 : vector<16x32xf32>
    %c0_39 = arith.constant 0 : index
    %c0_40 = arith.constant 0 : index
    %107 = vector.load %arg6[%c0_39, %c0_40] : memref<1x32xf32, #tpu.memory_space<vmem>>, vector<1x32xf32>
    %108 = vector.broadcast %107 : vector<1x32xf32> to vector<16x32xf32>
    %109 = arith.addf %106, %108 : vector<16x32xf32>
    %cst_41 = arith.constant dense<0.000000e+00> : vector<16xf32>
    %110 = vector.multi_reduction <add>, %109, %cst_41 [1] : vector<16x32xf32> to vector<16xf32>
    %111 = vector.shape_cast %110 : vector<16xf32> to vector<16x1xf32>
    %cst_42 = arith.constant 3.200000e+01 : f32
    %112 = vector.broadcast %cst_42 : f32 to vector<16x1xf32>
    %113 = arith.divf %111, %112 : vector<16x1xf32>
    %114 = vector.broadcast %113 : vector<16x1xf32> to vector<16x32xf32>
    %115 = arith.subf %109, %114 : vector<16x32xf32>
    %116 = arith.mulf %115, %115 : vector<16x32xf32>
    %cst_43 = arith.constant dense<0.000000e+00> : vector<16xf32>
    %117 = vector.multi_reduction <add>, %116, %cst_43 [1] : vector<16x32xf32> to vector<16xf32>
    %118 = vector.shape_cast %117 : vector<16xf32> to vector<16x1xf32>
    %cst_44 = arith.constant 3.200000e+01 : f32
    %119 = vector.broadcast %cst_44 : f32 to vector<16x1xf32>
    %120 = arith.divf %118, %119 : vector<16x1xf32>
    %121 = vector.broadcast %113 : vector<16x1xf32> to vector<16x32xf32>
    %122 = arith.subf %109, %121 : vector<16x32xf32>
    %cst_45 = arith.constant 9.99999974E-6 : f32
    %123 = vector.broadcast %cst_45 : f32 to vector<16x1xf32>
    %124 = arith.addf %120, %123 : vector<16x1xf32>
    %125 = math.rsqrt %124 : vector<16x1xf32>
    %126 = vector.broadcast %125 : vector<16x1xf32> to vector<16x32xf32>
    %127 = arith.mulf %122, %126 : vector<16x32xf32>
    %c0_46 = arith.constant 0 : index
    %c0_47 = arith.constant 0 : index
    %128 = vector.load %arg7[%c0_46, %c0_47] : memref<1x32xf32, #tpu.memory_space<vmem>>, vector<1x32xf32>
    %129 = vector.broadcast %128 : vector<1x32xf32> to vector<16x32xf32>
    %130 = arith.mulf %127, %129 : vector<16x32xf32>
    %c0_48 = arith.constant 0 : index
    %c0_49 = arith.constant 0 : index
    %131 = vector.load %arg8[%c0_48, %c0_49] : memref<1x32xf32, #tpu.memory_space<vmem>>, vector<1x32xf32>
    %132 = vector.broadcast %131 : vector<1x32xf32> to vector<16x32xf32>
    %133 = arith.addf %130, %132 : vector<16x32xf32>
    %c0_50 = arith.constant 0 : index
    %c0_51 = arith.constant 0 : index
    %134 = vector.load %arg9[%c0_50, %c0_51] : memref<32x128xf32, #tpu.memory_space<vmem>>, vector<32x128xf32>
    %cst_52 = arith.constant dense<0.000000e+00> : vector<16x128xf32>
    %135 = tpu.matmul %133, %134, %cst_52 {dimension_numbers = #tpu.dot_dimension_numbers<[1], [0], [0], [1], [0, 0, 1, 1], [], []>} : vector<16x32xf32>, vector<32x128xf32>, vector<16x128xf32> -> vector<16x128xf32>
    %c0_53 = arith.constant 0 : index
    %c0_54 = arith.constant 0 : index
    %136 = vector.load %arg10[%c0_53, %c0_54] : memref<1x128xf32, #tpu.memory_space<vmem>>, vector<1x128xf32>
    %137 = vector.broadcast %136 : vector<1x128xf32> to vector<16x128xf32>
    %138 = arith.addf %135, %137 : vector<16x128xf32>
    %cst_55 = arith.constant 5.000000e-01 : f32
    %139 = vector.broadcast %cst_55 : f32 to vector<16x128xf32>
    %140 = arith.mulf %139, %138 : vector<16x128xf32>
    %cst_56 = arith.constant 0.707106769 : f32
    %141 = vector.broadcast %cst_56 : f32 to vector<16x128xf32>
    %142 = arith.mulf %138, %141 : vector<16x128xf32>
    %143 = math.erf %142 : vector<16x128xf32>
    %cst_57 = arith.constant 1.000000e+00 : f32
    %144 = vector.broadcast %cst_57 : f32 to vector<16x128xf32>
    %145 = arith.addf %144, %143 : vector<16x128xf32>
    %146 = arith.mulf %140, %145 : vector<16x128xf32>
    %c0_58 = arith.constant 0 : index
    %c0_59 = arith.constant 0 : index
    %147 = vector.load %arg11[%c0_58, %c0_59] : memref<128x32xf32, #tpu.memory_space<vmem>>, vector<128x32xf32>
    %cst_60 = arith.constant dense<0.000000e+00> : vector<16x32xf32>
    %148 = tpu.matmul %146, %147, %cst_60 {dimension_numbers = #tpu.dot_dimension_numbers<[1], [0], [0], [1], [0, 0, 1, 1], [], []>} : vector<16x128xf32>, vector<128x32xf32>, vector<16x32xf32> -> vector<16x32xf32>
    %c0_61 = arith.constant 0 : index
    %c0_62 = arith.constant 0 : index
    %149 = vector.load %arg12[%c0_61, %c0_62] : memref<1x32xf32, #tpu.memory_space<vmem>>, vector<1x32xf32>
    %150 = vector.broadcast %149 : vector<1x32xf32> to vector<16x32xf32>
    %151 = arith.addf %148, %150 : vector<16x32xf32>
    %152 = arith.addf %109, %151 : vector<16x32xf32>
    %153 = vector.shape_cast %152 : vector<16x32xf32> to vector<2x8x32xf32>
    %c0_63 = arith.constant 0 : index
    %c0_64 = arith.constant 0 : index
    %c0_65 = arith.constant 0 : index
    %154 = vector.load %arg13[%c0_63, %c0_64, %c0_65] : memref<2x8x32xf32, #tpu.memory_space<vmem>>, vector<2x8x32xf32>
    tpu.vector_store %arg13[%c0_63, %c0_64, %c0_65], %153 {strides = array<i32>} : memref<2x8x32xf32, #tpu.memory_space<vmem>>, vector<2x8x32xf32>,
    return
  }
  func.func @transform_0(%arg0: i32) -> (i32, i32, i32) {
    %c0_i32 = arith.constant 0 : i32
    %c0_i32_0 = arith.constant 0 : i32
    %c0_i32_1 = arith.constant 0 : i32
    return %arg0, %c0_i32, %c0_i32_0 : i32, i32, i32
  }
  func.func @transform_1(%arg0: i32) -> (i32, i32) {
    %c0_i32 = arith.constant 0 : i32
    %c0_i32_0 = arith.constant 0 : i32
    %c0_i32_1 = arith.constant 0 : i32
    return %c0_i32, %c0_i32_0 : i32, i32
  }
  func.func @transform_2(%arg0: i32) -> (i32, i32) {
    %c0_i32 = arith.constant 0 : i32
    %c0_i32_0 = arith.constant 0 : i32
    %c0_i32_1 = arith.constant 0 : i32
    return %c0_i32, %c0_i32_0 : i32, i32
  }
  func.func @transform_3(%arg0: i32) -> (i32, i32) {
    %c0_i32 = arith.constant 0 : i32
    %c0_i32_0 = arith.constant 0 : i32
    %c0_i32_1 = arith.constant 0 : i32
    return %c0_i32, %c0_i32_0 : i32, i32
  }
  func.func @transform_4(%arg0: i32) -> (i32, i32) {
    %c0_i32 = arith.constant 0 : i32
    %c0_i32_0 = arith.constant 0 : i32
    %c0_i32_1 = arith.constant 0 : i32
    return %c0_i32, %c0_i32_0 : i32, i32
  }
  func.func @transform_5(%arg0: i32) -> (i32, i32) {
    %c0_i32 = arith.constant 0 : i32
    %c0_i32_0 = arith.constant 0 : i32
    %c0_i32_1 = arith.constant 0 : i32
    return %c0_i32, %c0_i32_0 : i32, i32
  }
  func.func @transform_6(%arg0: i32) -> (i32, i32) {
    %c0_i32 = arith.constant 0 : i32
    %c0_i32_0 = arith.constant 0 : i32
    %c0_i32_1 = arith.constant 0 : i32
    return %c0_i32, %c0_i32_0 : i32, i32
  }
  func.func @transform_7(%arg0: i32) -> (i32, i32) {
    %c0_i32 = arith.constant 0 : i32
    %c0_i32_0 = arith.constant 0 : i32
    %c0_i32_1 = arith.constant 0 : i32
    return %c0_i32, %c0_i32_0 : i32, i32
  }
  func.func @transform_8(%arg0: i32) -> (i32, i32) {
    %c0_i32 = arith.constant 0 : i32
    %c0_i32_0 = arith.constant 0 : i32
    %c0_i32_1 = arith.constant 0 : i32
    return %c0_i32, %c0_i32_0 : i32, i32
  }
  func.func @transform_9(%arg0: i32) -> (i32, i32) {
    %c0_i32 = arith.constant 0 : i32
    %c0_i32_0 = arith.constant 0 : i32
    %c0_i32_1 = arith.constant 0 : i32
    return %c0_i32, %c0_i32_0 : i32, i32
  }
  func.func @transform_10(%arg0: i32) -> (i32, i32) {
    %c0_i32 = arith.constant 0 : i32
    %c0_i32_0 = arith.constant 0 : i32
    %c0_i32_1 = arith.constant 0 : i32
    return %c0_i32, %c0_i32_0 : i32, i32
  }
  func.func @transform_11(%arg0: i32) -> (i32, i32) {
    %c0_i32 = arith.constant 0 : i32
    %c0_i32_0 = arith.constant 0 : i32
    %c0_i32_1 = arith.constant 0 : i32
    return %c0_i32, %c0_i32_0 : i32, i32
  }
  func.func @transform_12(%arg0: i32) -> (i32, i32, i32) {
    %c0_i32 = arith.constant 0 : i32
    %c0_i32_0 = arith.constant 0 : i32
    %c0_i32_1 = arith.constant 0 : i32
    return %arg0, %c0_i32, %c0_i32_0 : i32, i32, i32
  }
}

</mosaic_0001>

<llo_original>
// kernel: tpu_custom_call.1
$region0: #{tpu_custom_call.1}
  #allocation0 [shape = 'u32[]', space=smem, size = 0x4, offset = 0x4, fixed_abs, tag = 'smem constant byte address 0x4 - core index']
  #allocation1 [shape = 'u32[144,128]{1,0:T(1,128)}', space=vmem, size = 0x12000, scoped, tag = 'internal scratch']
  %s0 = inlined_call_operand.vmem [shape: f32[4,8,32], index: 0, kind: input, shape index: {}]
  %s1 = inlined_call_operand.vmem [shape: f32[1,32], index: 1, kind: input, shape index: {}]
  %s2 = inlined_call_operand.vmem [shape: f32[1,32], index: 2, kind: input, shape index: {}]
  %s3 = inlined_call_operand.vmem [shape: f32[32,96], index: 3, kind: input, shape index: {}]
  %s4 = inlined_call_operand.vmem [shape: f32[32,32], index: 4, kind: input, shape index: {}]
  %s5 = inlined_call_operand.vmem [shape: f32[1,32], index: 5, kind: input, shape index: {}]
  %s6 = inlined_call_operand.vmem [shape: f32[1,32], index: 6, kind: input, shape index: {}]
  %s7 = inlined_call_operand.vmem [shape: f32[1,32], index: 7, kind: input, shape index: {}]
  %s8 = inlined_call_operand.vmem [shape: f32[32,128], index: 8, kind: input, shape index: {}]
  %s9 = inlined_call_operand.vmem [shape: f32[1,128], index: 9, kind: input, shape index: {}]
  %s10 = inlined_call_operand.vmem [shape: f32[128,32], index: 10, kind: input, shape index: {}]
  %s11 = inlined_call_operand.vmem [shape: f32[1,32], index: 11, kind: input, shape index: {}]
  %s12 = inlined_call_operand.hbm [shape: f32[4,8,32], index: 12, kind: output, shape index: {}]
  %s13 = sld [smem:[#allocation0]]
  $region81: #{tpu_custom_call.1} parent=0
    _
  %s15 = ssub.s32 1, %s13
  %s16 = scalar_select 0, %s15, %s13
  $region1: #{tpu_custom_call.1} parent=0
    #allocation2 [shape = 'u8[16384]{0}', space=vmem, size = 0x4000, scoped, tag = 'output window, operand 0']
    #allocation3 [shape = 's32[2]{0}', space=sflag, size = 0x8, scoped, tag = 'scoped memory for tpu_custom_call.1']
    %17 = vsyncpa [#allocation3], 0
    %s18 = scalar_lea.sflag [#allocation3], 1
    %19 = vsyncpa %s18, 0
    loop: start=0, step=1, limit=4
    $region2: #{tpu_custom_call.1} parent=1 // loop_pre_header
      _
    $region3: #{tpu_custom_call.1} parent=1 // loop_header
      %s21 = sphi 0, %s25
      %p22 = scmp.ge.s32.totalorder %s21, 4
      %s31 = sphi 0, %s33
      %s34 = sphi 0, %s31
      %s35 = sphi 0, %s34
      %s51 = sphi 0, %s35
      %s55 = sphi 0, %s55
      %s57 = sphi 0, %s55
      %s58 = sphi 0, %s57
      %s72 = sphi 0, %s58
      %s76 = sphi 0, %s76
      %s78 = sphi 0, %s76
      %s79 = sphi 0, %s78
      %s93 = sphi 0, %s79
      %s97 = sphi 0, %s97
      %s99 = sphi 0, %s97
      %s100 = sphi 0, %s99
      %s114 = sphi 0, %s100
      %s118 = sphi 0, %s118
      %s120 = sphi 0, %s118
      %s121 = sphi 0, %s120
      %s135 = sphi 0, %s121
      %s139 = sphi 0, %s139
      %s141 = sphi 0, %s139
      %s142 = sphi 0, %s141
      %s156 = sphi 0, %s142
      %s160 = sphi 0, %s160
      %s162 = sphi 0, %s160
      %s163 = sphi 0, %s162
      %s177 = sphi 0, %s163
      %s181 = sphi 0, %s181
      %s183 = sphi 0, %s181
      %s184 = sphi 0, %s183
      %s198 = sphi 0, %s184
      %s202 = sphi 0, %s202
      %s204 = sphi 0, %s202
      %s205 = sphi 0, %s204
      %s219 = sphi 0, %s205
      %s223 = sphi 0, %s223
      %s225 = sphi 0, %s223
      %s226 = sphi 0, %s225
      %s240 = sphi 0, %s226
      %s244 = sphi 0, %s244
      %s246 = sphi 0, %s244
      %s247 = sphi 0, %s246
      %s261 = sphi 0, %s247
      %s265 = sphi 0, %s265
      %s267 = sphi 0, %s265
      %s268 = sphi 0, %s267
      %s282 = sphi 0, %s268
      %s288 = sphi 0, %s290
      %s291 = sphi 0, %s288
      %s292 = sphi 0, %s291
      %s308 = sphi 0, %s292
    $region4: #{tpu_custom_call.1} parent=1 // loop_header_branch
      %24 = sbr.rel (%p22) target = $region8
    $region5: #{tpu_custom_call.1} parent=1 // loop_body
      %s26 = ssub.s32 %s21, 1
      %s27 = ssub.s32 %s21, 2
      %s28 = sadd.s32 %s21, 1
      %s29 = ssub.s32 %s21, %s28
      %p30 = scmp.eq.s32.totalorder %s29, 0
      %s32 = sadd.s32 %s31, 1
      %s33 = scalar_select %p30, %s31, %s32
      %p36 = pneg %p30
      %p37 = scmp.eq.s32.totalorder %s21, 1
      %p38 = por %p36, %p37
      %p39 = scmp.ne.s32.totalorder %s31, %s34
      %p40 = scmp.eq.s32.totalorder %s21, 0
      %p41 = por %p39, %p40
      %p42 = scmp.ne.s32.totalorder %s31, %s34
      %p43 = scmp.eq.s32.totalorder %s26, 1
      %p44 = por %p42, %p43
      %p45 = scmp.ne.s32.totalorder %s34, %s35
      %p46 = scmp.eq.s32.totalorder %s26, 0
      %p47 = por %p45, %p46
      %p48 = scmp.ne.s32.totalorder %s34, %s35
      %p49 = scmp.eq.s32.totalorder %s27, 1
      %p50 = por %p48, %p49
      %p52 = scmp.ne.s32.totalorder %s35, %s51
      %p53 = scmp.eq.s32.totalorder %s27, 0
      %p54 = por %p52, %p53
      %s56 = sadd.s32 %s55, 1
      %p59 = scmp.eq.s32.totalorder %s21, 1
      %p60 = scmp.ne.s32.totalorder %s55, %s57
      %p61 = scmp.eq.s32.totalorder %s21, 0
      %p62 = por %p60, %p61
      %p63 = scmp.ne.s32.totalorder %s55, %s57
      %p64 = scmp.eq.s32.totalorder %s26, 1
      %p65 = por %p63, %p64
      %p66 = scmp.ne.s32.totalorder %s57, %s58
      %p67 = scmp.eq.s32.totalorder %s26, 0
      %p68 = por %p66, %p67
      %p69 = scmp.ne.s32.totalorder %s57, %s58
      %p70 = scmp.eq.s32.totalorder %s27, 1
      %p71 = por %p69, %p70
      %p73 = scmp.ne.s32.totalorder %s58, %s72
      %p74 = scmp.eq.s32.totalorder %s27, 0
      %p75 = por %p73, %p74
      %s77 = sadd.s32 %s76, 1
      %p80 = scmp.eq.s32.totalorder %s21, 1
      %p81 = scmp.ne.s32.totalorder %s76, %s78
      %p82 = scmp.eq.s32.totalorder %s21, 0
      %p83 = por %p81, %p82
      %p84 = scmp.ne.s32.totalorder %s76, %s78
      %p85 = scmp.eq.s32.totalorder %s26, 1
      %p86 = por %p84, %p85
      %p87 = scmp.ne.s32.totalorder %s78, %s79
      %p88 = scmp.eq.s32.totalorder %s26, 0
      %p89 = por %p87, %p88
      %p90 = scmp.ne.s32.totalorder %s78, %s79
      %p91 = scmp.eq.s32.totalorder %s27, 1
      %p92 = por %p90, %p91
      %p94 = scmp.ne.s32.totalorder %s79, %s93
      %p95 = scmp.eq.s32.totalorder %s27, 0
      %p96 = por %p94, %p95
      %s98 = sadd.s32 %s97, 1
      %p101 = scmp.eq.s32.totalorder %s21, 1
      %p102 = scmp.ne.s32.totalorder %s97, %s99
      %p103 = scmp.eq.s32.totalorder %s21, 0
      %p104 = por %p102, %p103
      %p105 = scmp.ne.s32.totalorder %s97, %s99
      %p106 = scmp.eq.s32.totalorder %s26, 1
      %p107 = por %p105, %p106
      %p108 = scmp.ne.s32.totalorder %s99, %s100
      %p109 = scmp.eq.s32.totalorder %s26, 0
      %p110 = por %p108, %p109
      %p111 = scmp.ne.s32.totalorder %s99, %s100
      %p112 = scmp.eq.s32.totalorder %s27, 1
      %p113 = por %p111, %p112
      %p115 = scmp.ne.s32.totalorder %s100, %s114
      %p116 = scmp.eq.s32.totalorder %s27, 0
      %p117 = por %p115, %p116
      %s119 = sadd.s32 %s118, 1
      %p122 = scmp.eq.s32.totalorder %s21, 1
      %p123 = scmp.ne.s32.totalorder %s118, %s120
      %p124 = scmp.eq.s32.totalorder %s21, 0
      %p125 = por %p123, %p124
      %p126 = scmp.ne.s32.totalorder %s118, %s120
      %p127 = scmp.eq.s32.totalorder %s26, 1
      %p128 = por %p126, %p127
      %p129 = scmp.ne.s32.totalorder %s120, %s121
      %p130 = scmp.eq.s32.totalorder %s26, 0
      %p131 = por %p129, %p130
      %p132 = scmp.ne.s32.totalorder %s120, %s121
      %p133 = scmp.eq.s32.totalorder %s27, 1
      %p134 = por %p132, %p133
      %p136 = scmp.ne.s32.totalorder %s121, %s135
      %p137 = scmp.eq.s32.totalorder %s27, 0
      %p138 = por %p136, %p137
      %s140 = sadd.s32 %s139, 1
      %p143 = scmp.eq.s32.totalorder %s21, 1
      %p144 = scmp.ne.s32.totalorder %s139, %s141
      %p145 = scmp.eq.s32.totalorder %s21, 0
      %p146 = por %p144, %p145
      %p147 = scmp.ne.s32.totalorder %s139, %s141
      %p148 = scmp.eq.s32.totalorder %s26, 1
      %p149 = por %p147, %p148
      %p150 = scmp.ne.s32.totalorder %s141, %s142
      %p151 = scmp.eq.s32.totalorder %s26, 0
      %p152 = por %p150, %p151
      %p153 = scmp.ne.s32.totalorder %s141, %s142
      %p154 = scmp.eq.s32.totalorder %s27, 1
      %p155 = por %p153, %p154
      %p157 = scmp.ne.s32.totalorder %s142, %s156
      %p158 = scmp.eq.s32.totalorder %s27, 0
      %p159 = por %p157, %p158
      %s161 = sadd.s32 %s160, 1
      %p164 = scmp.eq.s32.totalorder %s21, 1
      %p165 = scmp.ne.s32.totalorder %s160, %s162
      %p166 = scmp.eq.s32.totalorder %s21, 0
      %p167 = por %p165, %p166
      %p168 = scmp.ne.s32.totalorder %s160, %s162
      %p169 = scmp.eq.s32.totalorder %s26, 1
      %p170 = por %p168, %p169
      %p171 = scmp.ne.s32.totalorder %s162, %s163
      %p172 = scmp.eq.s32.totalorder %s26, 0
      %p173 = por %p171, %p172
      %p174 = scmp.ne.s32.totalorder %s162, %s163
      %p175 = scmp.eq.s32.totalorder %s27, 1
      %p176 = por %p174, %p175
      %p178 = scmp.ne.s32.totalorder %s163, %s177
      %p179 = scmp.eq.s32.totalorder %s27, 0
      %p180 = por %p178, %p179
      %s182 = sadd.s32 %s181, 1
      %p185 = scmp.eq.s32.totalorder %s21, 1
      %p186 = scmp.ne.s32.totalorder %s181, %s183
      %p187 = scmp.eq.s32.totalorder %s21, 0
      %p188 = por %p186, %p187
      %p189 = scmp.ne.s32.totalorder %s181, %s183
      %p190 = scmp.eq.s32.totalorder %s26, 1
      %p191 = por %p189, %p190
      %p192 = scmp.ne.s32.totalorder %s183, %s184
      %p193 = scmp.eq.s32.totalorder %s26, 0
      %p194 = por %p192, %p193
      %p195 = scmp.ne.s32.totalorder %s183, %s184
      %p196 = scmp.eq.s32.totalorder %s27, 1
      %p197 = por %p195, %p196
      %p199 = scmp.ne.s32.totalorder %s184, %s198
      %p200 = scmp.eq.s32.totalorder %s27, 0
      %p201 = por %p199, %p200
      %s203 = sadd.s32 %s202, 1
      %p206 = scmp.eq.s32.totalorder %s21, 1
      %p207 = scmp.ne.s32.totalorder %s202, %s204
      %p208 = scmp.eq.s32.totalorder %s21, 0
      %p209 = por %p207, %p208
      %p210 = scmp.ne.s32.totalorder %s202, %s204
      %p211 = scmp.eq.s32.totalorder %s26, 1
      %p212 = por %p210, %p211
      %p213 = scmp.ne.s32.totalorder %s204, %s205
      %p214 = scmp.eq.s32.totalorder %s26, 0
      %p215 = por %p213, %p214
      %p216 = scmp.ne.s32.totalorder %s204, %s205
      %p217 = scmp.eq.s32.totalorder %s27, 1
      %p218 = por %p216, %p217
      %p220 = scmp.ne.s32.totalorder %s205, %s219
      %p221 = scmp.eq.s32.totalorder %s27, 0
      %p222 = por %p220, %p221
      %s224 = sadd.s32 %s223, 1
      %p227 = scmp.eq.s32.totalorder %s21, 1
      %p228 = scmp.ne.s32.totalorder %s223, %s225
      %p229 = scmp.eq.s32.totalorder %s21, 0
      %p230 = por %p228, %p229
      %p231 = scmp.ne.s32.totalorder %s223, %s225
      %p232 = scmp.eq.s32.totalorder %s26, 1
      %p233 = por %p231, %p232
      %p234 = scmp.ne.s32.totalorder %s225, %s226
      %p235 = scmp.eq.s32.totalorder %s26, 0
      %p236 = por %p234, %p235
      %p237 = scmp.ne.s32.totalorder %s225, %s226
      %p238 = scmp.eq.s32.totalorder %s27, 1
      %p239 = por %p237, %p238
      %p241 = scmp.ne.s32.totalorder %s226, %s240
      %p242 = scmp.eq.s32.totalorder %s27, 0
      %p243 = por %p241, %p242
      %s245 = sadd.s32 %s244, 1
      %p248 = scmp.eq.s32.totalorder %s21, 1
      %p249 = scmp.ne.s32.totalorder %s244, %s246
      %p250 = scmp.eq.s32.totalorder %s21, 0
      %p251 = por %p249, %p250
      %p252 = scmp.ne.s32.totalorder %s244, %s246
      %p253 = scmp.eq.s32.totalorder %s26, 1
      %p254 = por %p252, %p253
      %p255 = scmp.ne.s32.totalorder %s246, %s247
      %p256 = scmp.eq.s32.totalorder %s26, 0
      %p257 = por %p255, %p256
      %p258 = scmp.ne.s32.totalorder %s246, %s247
      %p259 = scmp.eq.s32.totalorder %s27, 1
      %p260 = por %p258, %p259
      %p262 = scmp.ne.s32.totalorder %s247, %s261
      %p263 = scmp.eq.s32.totalorder %s27, 0
      %p264 = por %p262, %p263
      %s266 = sadd.s32 %s265, 1
      %p269 = scmp.eq.s32.totalorder %s21, 1
      %p270 = scmp.ne.s32.totalorder %s265, %s267
      %p271 = scmp.eq.s32.totalorder %s21, 0
      %p272 = por %p270, %p271
      %p273 = scmp.ne.s32.totalorder %s265, %s267
      %p274 = scmp.eq.s32.totalorder %s26, 1
      %p275 = por %p273, %p274
      %p276 = scmp.ne.s32.totalorder %s267, %s268
      %p277 = scmp.eq.s32.totalorder %s26, 0
      %p278 = por %p276, %p277
      %p279 = scmp.ne.s32.totalorder %s267, %s268
      %p280 = scmp.eq.s32.totalorder %s27, 1
      %p281 = por %p279, %p280
      %p283 = scmp.ne.s32.totalorder %s268, %s282
      %p284 = scmp.eq.s32.totalorder %s27, 0
      %p285 = por %p283, %p284
      %s286 = ssub.s32 %s21, %s28
      %p287 = scmp.eq.s32.totalorder %s286, 0
      %s289 = sadd.s32 %s288, 1
      %s290 = scalar_select %p287, %s288, %s289
      %p293 = pneg %p287
      %p294 = scmp.eq.s32.totalorder %s21, 1
      %p295 = por %p293, %p294
      %p296 = scmp.ne.s32.totalorder %s288, %s291
      %p297 = scmp.eq.s32.totalorder %s21, 0
      %p298 = por %p296, %p297
      %p299 = scmp.ne.s32.totalorder %s288, %s291
      %p300 = scmp.eq.s32.totalorder %s26, 1
      %p301 = por %p299, %p300
      %p302 = scmp.ne.s32.totalorder %s291, %s292
      %p303 = scmp.eq.s32.totalorder %s26, 0
      %p304 = por %p302, %p303
      %p305 = scmp.ne.s32.totalorder %s291, %s292
      %p306 = scmp.eq.s32.totalorder %s27, 1
      %p307 = por %p305, %p306
      %p309 = scmp.ne.s32.totalorder %s292, %s308
      %p310 = scmp.eq.s32.totalorder %s27, 0
      %p311 = por %p309, %p310
      %p312 = scmp.le.s32.totalorder 1, %s21
      %p313 = scmp.lt.s32.totalorder %s21, 3
      %p314 = pnand %p312, %p313
      %p315 = pneg %p314
      // Predicated region
      $region9: #{tpu_custom_call.1} parent=5 // pred_check
        _
      $region10: #{tpu_custom_call.1} parent=5 // pred_check_branch
        %317 = sbr.rel (%p314) target = $region12
      $region11: #{tpu_custom_call.1} parent=5 // pred_region
        %s318 = ssub.s32 %s21, 1
        // Predicated region
        $region13: #{tpu_custom_call.1} parent=11 // pred_check
          %p319 = pneg %p68
        $region14: #{tpu_custom_call.1} parent=11 // pred_check_branch
          %321 = sbr.rel (%p319) target = $region16
        $region15: #{tpu_custom_call.1} parent=11 // pred_region
          _
        $region16: #{tpu_custom_call.1} parent=11 // pred_fallthru
          _
        // Predicated region
        $region17: #{tpu_custom_call.1} parent=11 // pred_check
          %p322 = pneg %p89
        $region18: #{tpu_custom_call.1} parent=11 // pred_check_branch
          %324 = sbr.rel (%p322) target = $region20
        $region19: #{tpu_custom_call.1} parent=11 // pred_region
          _
        $region20: #{tpu_custom_call.1} parent=11 // pred_fallthru
          _
        // Predicated region
        $region21: #{tpu_custom_call.1} parent=11 // pred_check
          %p325 = pneg %p110
        $region22: #{tpu_custom_call.1} parent=11 // pred_check_branch
          %327 = sbr.rel (%p325) target = $region24
        $region23: #{tpu_custom_call.1} parent=11 // pred_region
          _
        $region24: #{tpu_custom_call.1} parent=11 // pred_fallthru
          _
        // Predicated region
        $region25: #{tpu_custom_call.1} parent=11 // pred_check
          %p328 = pneg %p131
        $region26: #{tpu_custom_call.1} parent=11 // pred_check_branch
          %330 = sbr.rel (%p328) target = $region28
        $region27: #{tpu_custom_call.1} parent=11 // pred_region
          _
        $region28: #{tpu_custom_call.1} parent=11 // pred_fallthru
          _
        // Predicated region
        $region29: #{tpu_custom_call.1} parent=11 // pred_check
          %p331 = pneg %p152
        $region30: #{tpu_custom_call.1} parent=11 // pred_check_branch
          %333 = sbr.rel (%p331) target = $region32
        $region31: #{tpu_custom_call.1} parent=11 // pred_region
          _
        $region32: #{tpu_custom_call.1} parent=11 // pred_fallthru
          _
        // Predicated region
        $region33: #{tpu_custom_call.1} parent=11 // pred_check
          %p334 = pneg %p173
        $region34: #{tpu_custom_call.1} parent=11 // pred_check_branch
          %336 = sbr.rel (%p334) target = $region36
        $region35: #{tpu_custom_call.1} parent=11 // pred_region
          _
        $region36: #{tpu_custom_call.1} parent=11 // pred_fallthru
          _
        // Predicated region
        $region37: #{tpu_custom_call.1} parent=11 // pred_check
          %p337 = pneg %p194
        $region38: #{tpu_custom_call.1} parent=11 // pred_check_branch
          %339 = sbr.rel (%p337) target = $region40
        $region39: #{tpu_custom_call.1} parent=11 // pred_region
          _
        $region40: #{tpu_custom_call.1} parent=11 // pred_fallthru
          _
        // Predicated region
        $region41: #{tpu_custom_call.1} parent=11 // pred_check
          %p340 = pneg %p215
        $region42: #{tpu_custom_call.1} parent=11 // pred_check_branch
          %342 = sbr.rel (%p340) target = $region44
        $region43: #{tpu_custom_call.1} parent=11 // pred_region
          _
        $region44: #{tpu_custom_call.1} parent=11 // pred_fallthru
          _
        // Predicated region
        $region45: #{tpu_custom_call.1} parent=11 // pred_check
          %p343 = pneg %p236
        $region46: #{tpu_custom_call.1} parent=11 // pred_check_branch
          %345 = sbr.rel (%p343) target = $region48
        $region47: #{tpu_custom_call.1} parent=11 // pred_region
          _
        $region48: #{tpu_custom_call.1} parent=11 // pred_fallthru
          _
        // Predicated region
        $region49: #{tpu_custom_call.1} parent=11 // pred_check
          %p346 = pneg %p257
        $region50: #{tpu_custom_call.1} parent=11 // pred_check_branch
          %348 = sbr.rel (%p346) target = $region52
        $region51: #{tpu_custom_call.1} parent=11 // pred_region
          _
        $region52: #{tpu_custom_call.1} parent=11 // pred_fallthru
          _
        // Predicated region
        $region53: #{tpu_custom_call.1} parent=11 // pred_check
          %p349 = pneg %p278
        $region54: #{tpu_custom_call.1} parent=11 // pred_check_branch
          %351 = sbr.rel (%p349) target = $region56
        $region55: #{tpu_custom_call.1} parent=11 // pred_region
          _
        $region56: #{tpu_custom_call.1} parent=11 // pred_fallthru
          _
      $region12: #{tpu_custom_call.1} parent=5 // pred_fallthru
        _
      %p352 = scmp.lt.s32.totalorder %s21, 2
      // Predicated region
      $region57: #{tpu_custom_call.1} parent=5 // pred_check
        %p353 = pneg %p352
      $region58: #{tpu_custom_call.1} parent=5 // pred_check_branch
        %355 = sbr.rel (%p353) target = $region60
      $region59: #{tpu_custom_call.1} parent=5 // pred_region
        // Predicated region
        $region61: #{tpu_custom_call.1} parent=59 // pred_check
          %p356 = pneg %p41
        $region62: #{tpu_custom_call.1} parent=59 // pred_check_branch
          %358 = sbr.rel (%p356) target = $region64
        $region63: #{tpu_custom_call.1} parent=59 // pred_region
          %s359 = smul.u32 2, %s21
          %p360 = scmp.lt.s32.totalorder %s359, 3
          %s361 = scalar_select %p360, %s359, 3
          %s362 = smul.addr %s361, 8
          %s363 = scalar_lea.vmem %s0, %s362
          %s364 = smul.u32 2, %s21
        $region64: #{tpu_custom_call.1} parent=59 // pred_fallthru
          _
      $region60: #{tpu_custom_call.1} parent=5 // pred_fallthru
        _
      %p365 = scmp.le.s32.totalorder 1, %s21
      %p366 = scmp.lt.s32.totalorder %s21, 3
      %p367 = pnand %p365, %p366
      %p368 = pneg %p367
      // Predicated region
      $region65: #{tpu_custom_call.1} parent=5 // pred_check
        _
      $region66: #{tpu_custom_call.1} parent=5 // pred_check_branch
        %370 = sbr.rel (%p367) target = $region68
      $region67: #{tpu_custom_call.1} parent=5 // pred_region
        %s371 = ssub.s32 %s21, 1
        %s372 = smul.u32 2, %s26
        %p373 = scmp.lt.s32.totalorder %s372, 3
        %s374 = scalar_select %p373, %s372, 3
        %s375 = smul.addr %s374, 8
        %s376 = scalar_lea.vmem %s0, %s375
        %p377 = pneg %p47
        %p378 = pneg %p44
        %p379 = pneg %p68
        %p380 = pneg %p65
        %p381 = pneg %p89
        %p382 = pneg %p86
        %p383 = pneg %p110
        %p384 = pneg %p107
        %p385 = pneg %p131
        %p386 = pneg %p128
        %p387 = pneg %p152
        %p388 = pneg %p149
        %p389 = pneg %p173
        %p390 = pneg %p170
        %p391 = pneg %p194
        %p392 = pneg %p191
        %p393 = pneg %p215
        %p394 = pneg %p212
        %p395 = pneg %p236
        %p396 = pneg %p233
        %p397 = pneg %p257
        %p398 = pneg %p254
        %p399 = pneg %p278
        %p400 = pneg %p275
        %p401 = pneg %p304
        %p402 = pneg %p301
        %s403 = sand.u32 %s291, 1
        %s404 = scalar_lea.sflag [#allocation3], %s403
        %s405 = sand.u32 %s291, 1
        %s406 = smul.addr %s405, 16
        %s407 = scalar_lea.vmem [#allocation2], %s406
        %s408 = smul.u32 2, %s26
        %p409 = scmp.lt.s32.totalorder %s408, 3
        %s410 = scalar_select %p409, %s408, 3
        %s411 = smul.addr %s410, 8
        %s412 = scalar_lea.vmem %s0, %s411
        %s413 = smul.u32 2, %s26
        %s414 = smul.u32 2, %s26
        %v415 = vld [vmem:[%s412] sm:$0xff]
        %v416 = vld [vmem:[%s412 + $0x8] sm:$0xff]
        %vm417 = vcmask 261120
        %v418 = vsel %vm417, %v415, 0.0
        %419 = vadd.xlane.f32.xlu0 %v418
        %v420 = vpop.xlane.xlu0 %419
        %v421 = vsel %vm417, %v416, 0.0
        %422 = vadd.xlane.f32.xlu0 %v421
        %v423 = vpop.xlane.xlu0 %422
        %v424 = vrcp.pop 32.0
        %v425 = vmul.f32 %v420, %v424
        %v426 = vmul.f32 %v423, %v424
        %v427 = vsub.f32 %v415, %v425
        %v428 = vsub.f32 %v416, %v426
        %v429 = vmul.f32 %v427, %v427
        %v430 = vmul.f32 %v428, %v428
        %v431 = vsel %vm417, %v429, 0.0
        %432 = vadd.xlane.f32.xlu0 %v431
        %v433 = vpop.xlane.xlu0 %432
        %v434 = vsel %vm417, %v430, 0.0
        %435 = vadd.xlane.f32.xlu0 %v434
        %v436 = vpop.xlane.xlu0 %435
        %v437 = vmul.f32 %v433, %v424
        %v438 = vmul.f32 %v436, %v424
        %v439 = vadd.f32 %v437, 1e-05
        %v440 = vadd.f32 %v438, 1e-05
        %v441 = vrsqrt.pop %v439
        %v442 = vrsqrt.pop %v440
        %v443 = vmul.f32 %v427, %v441
        %v444 = vmul.f32 %v428, %v442
        %v445 = vld [vmem:[%s1] sm:$0x1]
        %v447 = vlaneseq
        %v448 = vshrl.u32 %v447, 7
        %v449 = vsub.s32 0, %v448
        %v450 = vrot.slane %v445, %v449
        %v452 = vmul.f32 %v443, %v450
        %v453 = vmul.f32 %v444, %v450
        %v454 = vld [vmem:[%s2] sm:$0x1]
        %v456 = vlaneseq
        %v457 = vshrl.u32 %v456, 7
        %v458 = vsub.s32 0, %v457
        %v459 = vrot.slane %v454, %v458
        %v461 = vadd.f32 %v452, %v459
        %v462 = vadd.f32 %v453, %v459
        %v463 = vld [vmem:[%s3] sm:$0xff]
        %v464 = vld [vmem:[%s3 + $0x8] sm:$0xff]
        %v465 = vld [vmem:[%s3 + $0x10] sm:$0xff]
        %v466 = vld [vmem:[%s3 + $0x18] sm:$0xff]
        %v468 = vsel %vm417, %v461, 0
        %v471 = vsel %vm417, %v462, 0
        %473 = vmatprep.subr.mxu0 0.0
        %474 = vmatpush1.msra.mxu0 %v463
        %475 = vmatprep.subr.mxu0 0.0
        %476 = vmatpush1.msra.mxu0 %v464
        %477 = vmatprep.subr.mxu0 0.0
        %478 = vmatpush1.msra.mxu0 %v465
        %479 = vmatprep.subr.mxu0 0.0
        %480 = vmatpush1.msra.mxu0 %v466
        %481 = vmatprep.subr.mxu0 0.0
        %482 = vmatpush1.msra.mxu0 0.0
        %483 = vmatprep.subr.mxu0 0.0
        %484 = vmatpush1.msra.mxu0 0.0
        %485 = vmatprep.subr.mxu0 0.0
        %486 = vmatpush1.msra.mxu0 0.0
        %487 = vmatprep.subr.mxu0 0.0
        %488 = vmatpush1.msra.mxu0 0.0
        %489 = vmatprep.subr.mxu0 0.0
        %490 = vmatpush1.msra.mxu0 0.0
        %491 = vmatprep.subr.mxu0 0.0
        %492 = vmatpush1.msra.mxu0 0.0
        %493 = vmatprep.subr.mxu0 0.0
        %494 = vmatpush1.msra.mxu0 0.0
        %495 = vmatprep.subr.mxu0 0.0
        %496 = vmatpush1.msra.mxu0 0.0
        %497 = vmatprep.subr.mxu0 0.0
        %498 = vmatpush1.msra.mxu0 0.0
        %499 = vmatprep.subr.mxu0 0.0
        %500 = vmatpush1.msra.mxu0 0.0
        %501 = vmatprep.subr.mxu0 0.0
        %502 = vmatpush1.msra.mxu0 0.0
        %503 = vmatprep.subr.mxu0 0.0
        %504 = vmatpush1.msra.mxu0 0.0
        %505 = vmatprep.subr.mxu0 0.0
        %506 = vmatpush1.msra.mxu0 0.0
        %507 = vmatprep.subr.mxu0 0.0
        %508 = vmatpush1.msra.mxu0 0.0
        %509 = vmatprep.subr.mxu0 0.0
        %510 = vmatpush1.msra.mxu0 0.0
        %511 = vmatprep.subr.mxu0 0.0
        %512 = vmatpush1.msra.mxu0 0.0
        %513 = vmatprep.subr.mxu0 0.0
        %514 = vmatpush1.msra.mxu0 0.0
        %515 = vmatprep.subr.mxu0 0.0
        %516 = vmatpush1.msra.mxu0 0.0
        %517 = vmatprep.subr.mxu0 0.0
        %518 = vmatpush1.msra.mxu0 0.0
        %519 = vmatprep.subr.mxu0 0.0
        %520 = vmatpush1.msra.mxu0 0.0
        %521 = vmatprep.subr.mxu0 0.0
        %522 = vmatpush1.msra.mxu0 0.0
        %523 = vmatprep.subr.mxu0 0.0
        %524 = vmatpush1.msra.mxu0 0.0
        %525 = vmatprep.subr.mxu0 0.0
        %526 = vmatpush1.msra.mxu0 0.0
        %527 = vmatprep.subr.mxu0 0.0
        %528 = vmatpush1.msra.mxu0 0.0
        %529 = vmatprep.subr.mxu0 0.0
        %530 = vmatpush1.msra.mxu0 0.0
        %531 = vmatprep.subr.mxu0 0.0
        %532 = vmatpush1.msra.mxu0 0.0
        %533 = vmatprep.subr.mxu0 0.0
        %534 = vmatpush1.msra.mxu0 0.0
        %535 = vmatprep.subr.mxu0 0.0
        %536 = vmatpush1.msra.mxu0 0.0
        %537 = vmatprep.mubr.f32.mxu0 0.0
        %538 = vmatmul.mubr.f32.gmra.mrb[0].mxu0 %v468
        %v539 = vpop.f32.mrb[0].mxu0
        %v540 = vadd.f32 0.0, %v539
        %v541 = vpop.f32.mrb[0].mxu0
        %542 = vmatprep.mubr.f32.mxu0 0.0
        %543 = vmatmul.mubr.f32.gmra.mrb[0].mxu0 %v471
        %v544 = vpop.f32.mrb[0].mxu0
        %v545 = vadd.f32 0.0, %v544
        %v546 = vpop.f32.mrb[0].mxu0
        %547 = vdwg.mxu0
        %549 = vrot.lane.b32.xlu0 %v540, 96
        %v550 = vpop.permute.xlu0 %549
        %vm551 = vcmask 64512
        %v552 = vsel %vm551, %v540, 0
        %v554 = vsel %vm551, %v550, 0
        %556 = vmatprep.subr.mxu0 0.0
        %557 = vmatpush1.xpose.msra.mxu0 %v554
        %558 = vmatprep.subr.mxu0 0.0
        %559 = vmatpush1.xpose.msra.mxu0 0.0
        %560 = vmatprep.subr.mxu0 0.0
        %561 = vmatpush1.xpose.msra.mxu0 0.0
        %562 = vmatprep.subr.mxu0 0.0
        %563 = vmatpush1.xpose.msra.mxu0 0.0
        %564 = vmatprep.subr.mxu0 0.0
        %565 = vmatpush1.xpose.msra.mxu0 0.0
        %566 = vmatprep.subr.mxu0 0.0
        %567 = vmatpush1.xpose.msra.mxu0 0.0
        %568 = vmatprep.subr.mxu0 0.0
        %569 = vmatpush1.xpose.msra.mxu0 0.0
        %570 = vmatprep.subr.mxu0 0.0
        %571 = vmatpush1.xpose.msra.mxu0 0.0
        %572 = vmatprep.subr.mxu0 0.0
        %573 = vmatpush1.xpose.msra.mxu0 0.0
        %574 = vmatprep.subr.mxu0 0.0
        %575 = vmatpush1.xpose.msra.mxu0 0.0
        %576 = vmatprep.subr.mxu0 0.0
        %577 = vmatpush1.xpose.msra.mxu0 0.0
        %578 = vmatprep.subr.mxu0 0.0
        %579 = vmatpush1.xpose.msra.mxu0 0.0
        %580 = vmatprep.subr.mxu0 0.0
        %581 = vmatpush1.xpose.msra.mxu0 0.0
        %582 = vmatprep.subr.mxu0 0.0
        %583 = vmatpush1.xpose.msra.mxu0 0.0
        %584 = vmatprep.subr.mxu0 0.0
        %585 = vmatpush1.xpose.msra.mxu0 0.0
        %586 = vmatprep.subr.mxu0 0.0
        %587 = vmatpush1.xpose.msra.mxu0 0.0
        %588 = vmatprep.subr.mxu0 0.0
        %589 = vmatpush1.xpose.msra.mxu0 0.0
        %590 = vmatprep.subr.mxu0 0.0
        %591 = vmatpush1.xpose.msra.mxu0 0.0
        %592 = vmatprep.subr.mxu0 0.0
        %593 = vmatpush1.xpose.msra.mxu0 0.0
        %594 = vmatprep.subr.mxu0 0.0
        %595 = vmatpush1.xpose.msra.mxu0 0.0
        %596 = vmatprep.subr.mxu0 0.0
        %597 = vmatpush1.xpose.msra.mxu0 0.0
        %598 = vmatprep.subr.mxu0 0.0
        %599 = vmatpush1.xpose.msra.mxu0 0.0
        %600 = vmatprep.subr.mxu0 0.0
        %601 = vmatpush1.xpose.msra.mxu0 0.0
        %602 = vmatprep.subr.mxu0 0.0
        %603 = vmatpush1.xpose.msra.mxu0 0.0
        %604 = vmatprep.subr.mxu0 0.0
        %605 = vmatpush1.xpose.msra.mxu0 0.0
        %606 = vmatprep.subr.mxu0 0.0
        %607 = vmatpush1.xpose.msra.mxu0 0.0
        %608 = vmatprep.subr.mxu0 0.0
        %609 = vmatpush1.xpose.msra.mxu0 0.0
        %610 = vmatprep.subr.mxu0 0.0
        %611 = vmatpush1.xpose.msra.mxu0 0.0
        %612 = vmatprep.subr.mxu0 0.0
        %613 = vmatpush1.xpose.msra.mxu0 0.0
        %614 = vmatprep.subr.mxu0 0.0
        %615 = vmatpush1.xpose.msra.mxu0 0.0
        %616 = vmatprep.subr.mxu0 0.0
        %617 = vmatpush1.xpose.msra.mxu0 0.0
        %618 = vmatprep.subr.mxu0 0.0
        %619 = vmatpush1.xpose.msra.mxu0 0.0
        %620 = vmatprep.mubr.f32.mxu0 0.0
        %621 = vmatmul.mubr.f32.gmra.mrb[0].mxu0 %v552
        %v622 = vpop.f32.mrb[0].mxu0
        %v623 = vadd.f32 0.0, %v622
        %v624 = vpop.f32.mrb[0].mxu0
        %625 = vdwg.mxu0
        %627 = vrot.lane.b32.xlu0 %v545, 96
        %v628 = vpop.permute.xlu0 %627
        %v629 = vsel %vm551, %v545, 0
        %v631 = vsel %vm551, %v628, 0
        %633 = vmatprep.subr.mxu0 0.0
        %634 = vmatpush1.xpose.msra.mxu0 %v631
        %635 = vmatprep.subr.mxu0 0.0
        %636 = vmatpush1.xpose.msra.mxu0 0.0
        %637 = vmatprep.subr.mxu0 0.0
        %638 = vmatpush1.xpose.msra.mxu0 0.0
        %639 = vmatprep.subr.mxu0 0.0
        %640 = vmatpush1.xpose.msra.mxu0 0.0
        %641 = vmatprep.subr.mxu0 0.0
        %642 = vmatpush1.xpose.msra.mxu0 0.0
        %643 = vmatprep.subr.mxu0 0.0
        %644 = vmatpush1.xpose.msra.mxu0 0.0
        %645 = vmatprep.subr.mxu0 0.0
        %646 = vmatpush1.xpose.msra.mxu0 0.0
        %647 = vmatprep.subr.mxu0 0.0
        %648 = vmatpush1.xpose.msra.mxu0 0.0
        %649 = vmatprep.subr.mxu0 0.0
        %650 = vmatpush1.xpose.msra.mxu0 0.0
        %651 = vmatprep.subr.mxu0 0.0
        %652 = vmatpush1.xpose.msra.mxu0 0.0
        %653 = vmatprep.subr.mxu0 0.0
        %654 = vmatpush1.xpose.msra.mxu0 0.0
        %655 = vmatprep.subr.mxu0 0.0
        %656 = vmatpush1.xpose.msra.mxu0 0.0
        %657 = vmatprep.subr.mxu0 0.0
        %658 = vmatpush1.xpose.msra.mxu0 0.0
        %659 = vmatprep.subr.mxu0 0.0
        %660 = vmatpush1.xpose.msra.mxu0 0.0
        %661 = vmatprep.subr.mxu0 0.0
        %662 = vmatpush1.xpose.msra.mxu0 0.0
        %663 = vmatprep.subr.mxu0 0.0
        %664 = vmatpush1.xpose.msra.mxu0 0.0
        %665 = vmatprep.subr.mxu0 0.0
        %666 = vmatpush1.xpose.msra.mxu0 0.0
        %667 = vmatprep.subr.mxu0 0.0
        %668 = vmatpush1.xpose.msra.mxu0 0.0
        %669 = vmatprep.subr.mxu0 0.0
        %670 = vmatpush1.xpose.msra.mxu0 0.0
        %671 = vmatprep.subr.mxu0 0.0
        %672 = vmatpush1.xpose.msra.mxu0 0.0
        %673 = vmatprep.subr.mxu0 0.0
        %674 = vmatpush1.xpose.msra.mxu0 0.0
        %675 = vmatprep.subr.mxu0 0.0
        %676 = vmatpush1.xpose.msra.mxu0 0.0
        %677 = vmatprep.subr.mxu0 0.0
        %678 = vmatpush1.xpose.msra.mxu0 0.0
        %679 = vmatprep.subr.mxu0 0.0
        %680 = vmatpush1.xpose.msra.mxu0 0.0
        %681 = vmatprep.subr.mxu0 0.0
        %682 = vmatpush1.xpose.msra.mxu0 0.0
        %683 = vmatprep.subr.mxu0 0.0
        %684 = vmatpush1.xpose.msra.mxu0 0.0
        %685 = vmatprep.subr.mxu0 0.0
        %686 = vmatpush1.xpose.msra.mxu0 0.0
        %687 = vmatprep.subr.mxu0 0.0
        %688 = vmatpush1.xpose.msra.mxu0 0.0
        %689 = vmatprep.subr.mxu0 0.0
        %690 = vmatpush1.xpose.msra.mxu0 0.0
        %691 = vmatprep.subr.mxu0 0.0
        %692 = vmatpush1.xpose.msra.mxu0 0.0
        %693 = vmatprep.subr.mxu0 0.0
        %694 = vmatpush1.xpose.msra.mxu0 0.0
        %695 = vmatprep.subr.mxu0 0.0
        %696 = vmatpush1.xpose.msra.mxu0 0.0
        %697 = vmatprep.mubr.f32.mxu0 0.0
        %698 = vmatmul.mubr.f32.gmra.mrb[0].mxu0 %v629
        %v699 = vpop.f32.mrb[0].mxu0
        %v700 = vadd.f32 0.0, %v699
        %v701 = vpop.f32.mrb[0].mxu0
        %702 = vdwg.mxu0
        %v703 = vsel %vm551, %v623, -inf
        %704 = vmax.xlane.f32.xlu0 %v703
        %v705 = vpop.xlane.xlu0 %704
        %v706 = vsel %vm551, %v700, -inf
        %707 = vmax.xlane.f32.xlu0 %v706
        %v708 = vpop.xlane.xlu0 %707
        %v709 = vsub.f32 %v623, %v705
        %v710 = vsub.f32 %v700, %v708
        %v711 = vmul.f32 %v709, 1.442695
        %v712 = vpow.pop %v711
        %v713 = vmul.f32 %v710, 1.442695
        %v714 = vpow.pop %v713
        %v715 = vsel %vm551, %v712, 0.0
        %716 = vadd.xlane.f32.xlu0 %v715
        %v717 = vpop.xlane.xlu0 %716
        %v718 = vsel %vm551, %v714, 0.0
        %719 = vadd.xlane.f32.xlu0 %v718
        %v720 = vpop.xlane.xlu0 %719
        %v721 = vrcp.pop %v717
        %v722 = vrcp.pop %v720
        %v723 = vmul.f32 %v712, %v721
        %v724 = vmul.f32 %v714, %v722
        %725 = vrot.lane.b32.xlu0 %v540, 64
        %v726 = vpop.permute.xlu0 %725
        %v729 = vsel %vm551, %v723, 0
        %731 = vmatprep.subr.mxu0 0.0
        %732 = vmatpush1.msra.mxu0 %v726
        %733 = vmatprep.subr.mxu0 0.0
        %734 = vmatpush1.msra.mxu0 0.0
        %735 = vmatprep.subr.mxu0 0.0
        %736 = vmatpush1.msra.mxu0 0.0
        %737 = vmatprep.subr.mxu0 0.0
        %738 = vmatpush1.msra.mxu0 0.0
        %739 = vmatprep.subr.mxu0 0.0
        %740 = vmatpush1.msra.mxu0 0.0
        %741 = vmatprep.subr.mxu0 0.0
        %742 = vmatpush1.msra.mxu0 0.0
        %743 = vmatprep.subr.mxu0 0.0
        %744 = vmatpush1.msra.mxu0 0.0
        %745 = vmatprep.subr.mxu0 0.0
        %746 = vmatpush1.msra.mxu0 0.0
        %747 = vmatprep.subr.mxu0 0.0
        %748 = vmatpush1.msra.mxu0 0.0
        %749 = vmatprep.subr.mxu0 0.0
        %750 = vmatpush1.msra.mxu0 0.0
        %751 = vmatprep.subr.mxu0 0.0
        %752 = vmatpush1.msra.mxu0 0.0
        %753 = vmatprep.subr.mxu0 0.0
        %754 = vmatpush1.msra.mxu0 0.0
        %755 = vmatprep.subr.mxu0 0.0
        %756 = vmatpush1.msra.mxu0 0.0
        %757 = vmatprep.subr.mxu0 0.0
        %758 = vmatpush1.msra.mxu0 0.0
        %759 = vmatprep.subr.mxu0 0.0
        %760 = vmatpush1.msra.mxu0 0.0
        %761 = vmatprep.subr.mxu0 0.0
        %762 = vmatpush1.msra.mxu0 0.0
        %763 = vmatprep.subr.mxu0 0.0
        %764 = vmatpush1.msra.mxu0 0.0
        %765 = vmatprep.subr.mxu0 0.0
        %766 = vmatpush1.msra.mxu0 0.0
        %767 = vmatprep.subr.mxu0 0.0
        %768 = vmatpush1.msra.mxu0 0.0
        %769 = vmatprep.subr.mxu0 0.0
        %770 = vmatpush1.msra.mxu0 0.0
        %771 = vmatprep.subr.mxu0 0.0
        %772 = vmatpush1.msra.mxu0 0.0
        %773 = vmatprep.subr.mxu0 0.0
        %774 = vmatpush1.msra.mxu0 0.0
        %775 = vmatprep.subr.mxu0 0.0
        %776 = vmatpush1.msra.mxu0 0.0
        %777 = vmatprep.subr.mxu0 0.0
        %778 = vmatpush1.msra.mxu0 0.0
        %779 = vmatprep.subr.mxu0 0.0
        %780 = vmatpush1.msra.mxu0 0.0
        %781 = vmatprep.subr.mxu0 0.0
        %782 = vmatpush1.msra.mxu0 0.0
        %783 = vmatprep.subr.mxu0 0.0
        %784 = vmatpush1.msra.mxu0 0.0
        %785 = vmatprep.subr.mxu0 0.0
        %786 = vmatpush1.msra.mxu0 0.0
        %787 = vmatprep.subr.mxu0 0.0
        %788 = vmatpush1.msra.mxu0 0.0
        %789 = vmatprep.subr.mxu0 0.0
        %790 = vmatpush1.msra.mxu0 0.0
        %791 = vmatprep.subr.mxu0 0.0
        %792 = vmatpush1.msra.mxu0 0.0
        %793 = vmatprep.subr.mxu0 0.0
        %794 = vmatpush1.msra.mxu0 0.0
        %795 = vmatprep.mubr.f32.mxu0 0.0
        %796 = vmatmul.mubr.f32.gmra.mrb[0].mxu0 %v729
        %v797 = vpop.f32.mrb[0].mxu0
        %v798 = vadd.f32 0.0, %v797
        %v799 = vpop.f32.mrb[0].mxu0
        %800 = vdwg.mxu0
        %801 = vrot.lane.b32.xlu0 %v545, 64
        %v802 = vpop.permute.xlu0 %801
        %v805 = vsel %vm551, %v724, 0
        %807 = vmatprep.subr.mxu0 0.0
        %808 = vmatpush1.msra.mxu0 %v802
        %809 = vmatprep.subr.mxu0 0.0
        %810 = vmatpush1.msra.mxu0 0.0
        %811 = vmatprep.subr.mxu0 0.0
        %812 = vmatpush1.msra.mxu0 0.0
        %813 = vmatprep.subr.mxu0 0.0
        %814 = vmatpush1.msra.mxu0 0.0
        %815 = vmatprep.subr.mxu0 0.0
        %816 = vmatpush1.msra.mxu0 0.0
        %817 = vmatprep.subr.mxu0 0.0
        %818 = vmatpush1.msra.mxu0 0.0
        %819 = vmatprep.subr.mxu0 0.0
        %820 = vmatpush1.msra.mxu0 0.0
        %821 = vmatprep.subr.mxu0 0.0
        %822 = vmatpush1.msra.mxu0 0.0
        %823 = vmatprep.subr.mxu0 0.0
        %824 = vmatpush1.msra.mxu0 0.0
        %825 = vmatprep.subr.mxu0 0.0
        %826 = vmatpush1.msra.mxu0 0.0
        %827 = vmatprep.subr.mxu0 0.0
        %828 = vmatpush1.msra.mxu0 0.0
        %829 = vmatprep.subr.mxu0 0.0
        %830 = vmatpush1.msra.mxu0 0.0
        %831 = vmatprep.subr.mxu0 0.0
        %832 = vmatpush1.msra.mxu0 0.0
        %833 = vmatprep.subr.mxu0 0.0
        %834 = vmatpush1.msra.mxu0 0.0
        %835 = vmatprep.subr.mxu0 0.0
        %836 = vmatpush1.msra.mxu0 0.0
        %837 = vmatprep.subr.mxu0 0.0
        %838 = vmatpush1.msra.mxu0 0.0
        %839 = vmatprep.subr.mxu0 0.0
        %840 = vmatpush1.msra.mxu0 0.0
        %841 = vmatprep.subr.mxu0 0.0
        %842 = vmatpush1.msra.mxu0 0.0
        %843 = vmatprep.subr.mxu0 0.0
        %844 = vmatpush1.msra.mxu0 0.0
        %845 = vmatprep.subr.mxu0 0.0
        %846 = vmatpush1.msra.mxu0 0.0
        %847 = vmatprep.subr.mxu0 0.0
        %848 = vmatpush1.msra.mxu0 0.0
        %849 = vmatprep.subr.mxu0 0.0
        %850 = vmatpush1.msra.mxu0 0.0
        %851 = vmatprep.subr.mxu0 0.0
        %852 = vmatpush1.msra.mxu0 0.0
        %853 = vmatprep.subr.mxu0 0.0
        %854 = vmatpush1.msra.mxu0 0.0
        %855 = vmatprep.subr.mxu0 0.0
        %856 = vmatpush1.msra.mxu0 0.0
        %857 = vmatprep.subr.mxu0 0.0
        %858 = vmatpush1.msra.mxu0 0.0
        %859 = vmatprep.subr.mxu0 0.0
        %860 = vmatpush1.msra.mxu0 0.0
        %861 = vmatprep.subr.mxu0 0.0
        %862 = vmatpush1.msra.mxu0 0.0
        %863 = vmatprep.subr.mxu0 0.0
        %864 = vmatpush1.msra.mxu0 0.0
        %865 = vmatprep.subr.mxu0 0.0
        %866 = vmatpush1.msra.mxu0 0.0
        %867 = vmatprep.subr.mxu0 0.0
        %868 = vmatpush1.msra.mxu0 0.0
        %869 = vmatprep.subr.mxu0 0.0
        %870 = vmatpush1.msra.mxu0 0.0
        %871 = vmatprep.mubr.f32.mxu0 0.0
        %872 = vmatmul.mubr.f32.gmra.mrb[0].mxu0 %v805
        %v873 = vpop.f32.mrb[0].mxu0
        %v874 = vadd.f32 0.0, %v873
        %v875 = vpop.f32.mrb[0].mxu0
        %876 = vdwg.mxu0
        %v877 = vld [vmem:[%s4] sm:$0xff]
        %878 = vrot.lane.b32.xlu0 %v540, 120
        %v879 = vpop.permute.xlu0 %878
        %880 = vrot.lane.b32.xlu0 %v540, 88
        %v881 = vpop.permute.xlu0 %880
        %v882 = vsel %vm551, %v879, 0
        %v884 = vsel %vm551, %v881, 0
        %886 = vmatprep.subr.mxu0 0.0
        %887 = vmatpush1.xpose.msra.mxu0 %v884
        %888 = vmatprep.subr.mxu0 0.0
        %889 = vmatpush1.xpose.msra.mxu0 0.0
        %890 = vmatprep.subr.mxu0 0.0
        %891 = vmatpush1.xpose.msra.mxu0 0.0
        %892 = vmatprep.subr.mxu0 0.0
        %893 = vmatpush1.xpose.msra.mxu0 0.0
        %894 = vmatprep.subr.mxu0 0.0
        %895 = vmatpush1.xpose.msra.mxu0 0.0
        %896 = vmatprep.subr.mxu0 0.0
        %897 = vmatpush1.xpose.msra.mxu0 0.0
        %898 = vmatprep.subr.mxu0 0.0
        %899 = vmatpush1.xpose.msra.mxu0 0.0
        %900 = vmatprep.subr.mxu0 0.0
        %901 = vmatpush1.xpose.msra.mxu0 0.0
        %902 = vmatprep.subr.mxu0 0.0
        %903 = vmatpush1.xpose.msra.mxu0 0.0
        %904 = vmatprep.subr.mxu0 0.0
        %905 = vmatpush1.xpose.msra.mxu0 0.0
        %906 = vmatprep.subr.mxu0 0.0
        %907 = vmatpush1.xpose.msra.mxu0 0.0
        %908 = vmatprep.subr.mxu0 0.0
        %909 = vmatpush1.xpose.msra.mxu0 0.0
        %910 = vmatprep.subr.mxu0 0.0
        %911 = vmatpush1.xpose.msra.mxu0 0.0
        %912 = vmatprep.subr.mxu0 0.0
        %913 = vmatpush1.xpose.msra.mxu0 0.0
        %914 = vmatprep.subr.mxu0 0.0
        %915 = vmatpush1.xpose.msra.mxu0 0.0
        %916 = vmatprep.subr.mxu0 0.0
        %917 = vmatpush1.xpose.msra.mxu0 0.0
        %918 = vmatprep.subr.mxu0 0.0
        %919 = vmatpush1.xpose.msra.mxu0 0.0
        %920 = vmatprep.subr.mxu0 0.0
        %921 = vmatpush1.xpose.msra.mxu0 0.0
        %922 = vmatprep.subr.mxu0 0.0
        %923 = vmatpush1.xpose.msra.mxu0 0.0
        %924 = vmatprep.subr.mxu0 0.0
        %925 = vmatpush1.xpose.msra.mxu0 0.0
        %926 = vmatprep.subr.mxu0 0.0
        %927 = vmatpush1.xpose.msra.mxu0 0.0
        %928 = vmatprep.subr.mxu0 0.0
        %929 = vmatpush1.xpose.msra.mxu0 0.0
        %930 = vmatprep.subr.mxu0 0.0
        %931 = vmatpush1.xpose.msra.mxu0 0.0
        %932 = vmatprep.subr.mxu0 0.0
        %933 = vmatpush1.xpose.msra.mxu0 0.0
        %934 = vmatprep.subr.mxu0 0.0
        %935 = vmatpush1.xpose.msra.mxu0 0.0
        %936 = vmatprep.subr.mxu0 0.0
        %937 = vmatpush1.xpose.msra.mxu0 0.0
        %938 = vmatprep.subr.mxu0 0.0
        %939 = vmatpush1.xpose.msra.mxu0 0.0
        %940 = vmatprep.subr.mxu0 0.0
        %941 = vmatpush1.xpose.msra.mxu0 0.0
        %942 = vmatprep.subr.mxu0 0.0
        %943 = vmatpush1.xpose.msra.mxu0 0.0
        %944 = vmatprep.subr.mxu0 0.0
        %945 = vmatpush1.xpose.msra.mxu0 0.0
        %946 = vmatprep.subr.mxu0 0.0
        %947 = vmatpush1.xpose.msra.mxu0 0.0
        %948 = vmatprep.subr.mxu0 0.0
        %949 = vmatpush1.xpose.msra.mxu0 0.0
        %950 = vmatprep.mubr.f32.mxu0 0.0
        %951 = vmatmul.mubr.f32.gmra.mrb[0].mxu0 %v882
        %v952 = vpop.f32.mrb[0].mxu0
        %v953 = vadd.f32 0.0, %v952
        %v954 = vpop.f32.mrb[0].mxu0
        %955 = vdwg.mxu0
        %956 = vrot.lane.b32.xlu0 %v545, 120
        %v957 = vpop.permute.xlu0 %956
        %958 = vrot.lane.b32.xlu0 %v545, 88
        %v959 = vpop.permute.xlu0 %958
        %v960 = vsel %vm551, %v957, 0
        %v962 = vsel %vm551, %v959, 0
        %964 = vmatprep.subr.mxu0 0.0
        %965 = vmatpush1.xpose.msra.mxu0 %v962
        %966 = vmatprep.subr.mxu0 0.0
        %967 = vmatpush1.xpose.msra.mxu0 0.0
        %968 = vmatprep.subr.mxu0 0.0
        %969 = vmatpush1.xpose.msra.mxu0 0.0
        %970 = vmatprep.subr.mxu0 0.0
        %971 = vmatpush1.xpose.msra.mxu0 0.0
        %972 = vmatprep.subr.mxu0 0.0
        %973 = vmatpush1.xpose.msra.mxu0 0.0
        %974 = vmatprep.subr.mxu0 0.0
        %975 = vmatpush1.xpose.msra.mxu0 0.0
        %976 = vmatprep.subr.mxu0 0.0
        %977 = vmatpush1.xpose.msra.mxu0 0.0
        %978 = vmatprep.subr.mxu0 0.0
        %979 = vmatpush1.xpose.msra.mxu0 0.0
        %980 = vmatprep.subr.mxu0 0.0
        %981 = vmatpush1.xpose.msra.mxu0 0.0
        %982 = vmatprep.subr.mxu0 0.0
        %983 = vmatpush1.xpose.msra.mxu0 0.0
        %984 = vmatprep.subr.mxu0 0.0
        %985 = vmatpush1.xpose.msra.mxu0 0.0
        %986 = vmatprep.subr.mxu0 0.0
        %987 = vmatpush1.xpose.msra.mxu0 0.0
        %988 = vmatprep.subr.mxu0 0.0
        %989 = vmatpush1.xpose.msra.mxu0 0.0
        %990 = vmatprep.subr.mxu0 0.0
        %991 = vmatpush1.xpose.msra.mxu0 0.0
        %992 = vmatprep.subr.mxu0 0.0
        %993 = vmatpush1.xpose.msra.mxu0 0.0
        %994 = vmatprep.subr.mxu0 0.0
        %995 = vmatpush1.xpose.msra.mxu0 0.0
        %996 = vmatprep.subr.mxu0 0.0
        %997 = vmatpush1.xpose.msra.mxu0 0.0
        %998 = vmatprep.subr.mxu0 0.0
        %999 = vmatpush1.xpose.msra.mxu0 0.0
        %1000 = vmatprep.subr.mxu0 0.0
        %1001 = vmatpush1.xpose.msra.mxu0 0.0
        %1002 = vmatprep.subr.mxu0 0.0
        %1003 = vmatpush1.xpose.msra.mxu0 0.0
        %1004 = vmatprep.subr.mxu0 0.0
        %1005 = vmatpush1.xpose.msra.mxu0 0.0
        %1006 = vmatprep.subr.mxu0 0.0
        %1007 = vmatpush1.xpose.msra.mxu0 0.0
        %1008 = vmatprep.subr.mxu0 0.0
        %1009 = vmatpush1.xpose.msra.mxu0 0.0
        %1010 = vmatprep.subr.mxu0 0.0
        %1011 = vmatpush1.xpose.msra.mxu0 0.0
        %1012 = vmatprep.subr.mxu0 0.0
        %1013 = vmatpush1.xpose.msra.mxu0 0.0
        %1014 = vmatprep.subr.mxu0 0.0
        %1015 = vmatpush1.xpose.msra.mxu0 0.0
        %1016 = vmatprep.subr.mxu0 0.0
        %1017 = vmatpush1.xpose.msra.mxu0 0.0
        %1018 = vmatprep.subr.mxu0 0.0
        %1019 = vmatpush1.xpose.msra.mxu0 0.0
        %1020 = vmatprep.subr.mxu0 0.0
        %1021 = vmatpush1.xpose.msra.mxu0 0.0
        %1022 = vmatprep.subr.mxu0 0.0
        %1023 = vmatpush1.xpose.msra.mxu0 0.0
        %1024 = vmatprep.subr.mxu0 0.0
        %1025 = vmatpush1.xpose.msra.mxu0 0.0
        %1026 = vmatprep.subr.mxu0 0.0
        %1027 = vmatpush1.xpose.msra.mxu0 0.0
        %1028 = vmatprep.mubr.f32.mxu0 0.0
        %1029 = vmatmul.mubr.f32.gmra.mrb[0].mxu0 %v960
        %v1030 = vpop.f32.mrb[0].mxu0
        %v1031 = vadd.f32 0.0, %v1030
        %v1032 = vpop.f32.mrb[0].mxu0
        %1033 = vdwg.mxu0
        %v1034 = vsel %vm551, %v953, -inf
        %1035 = vmax.xlane.f32.xlu0 %v1034
        %v1036 = vpop.xlane.xlu0 %1035
        %v1037 = vsel %vm551, %v1031, -inf
        %1038 = vmax.xlane.f32.xlu0 %v1037
        %v1039 = vpop.xlane.xlu0 %1038
        %v1040 = vsub.f32 %v953, %v1036
        %v1041 = vsub.f32 %v1031, %v1039
        %v1042 = vmul.f32 %v1040, 1.442695
        %v1043 = vpow.pop %v1042
        %v1044 = vmul.f32 %v1041, 1.442695
        %v1045 = vpow.pop %v1044
        %v1046 = vsel %vm551, %v1043, 0.0
        %1047 = vadd.xlane.f32.xlu0 %v1046
        %v1048 = vpop.xlane.xlu0 %1047
        %v1049 = vsel %vm551, %v1045, 0.0
        %1050 = vadd.xlane.f32.xlu0 %v1049
        %v1051 = vpop.xlane.xlu0 %1050
        %v1052 = vrcp.pop %v1048
        %v1053 = vrcp.pop %v1051
        %v1054 = vmul.f32 %v1043, %v1052
        %v1055 = vmul.f32 %v1045, %v1053
        %1056 = vrot.lane.b32.xlu0 %v540, 56
        %v1057 = vpop.permute.xlu0 %1056
        %v1060 = vsel %vm551, %v1054, 0
        %1062 = vmatprep.subr.mxu0 0.0
        %1063 = vmatpush1.msra.mxu0 %v1057
        %1064 = vmatprep.subr.mxu0 0.0
        %1065 = vmatpush1.msra.mxu0 0.0
        %1066 = vmatprep.subr.mxu0 0.0
        %1067 = vmatpush1.msra.mxu0 0.0
        %1068 = vmatprep.subr.mxu0 0.0
        %1069 = vmatpush1.msra.mxu0 0.0
        %1070 = vmatprep.subr.mxu0 0.0
        %1071 = vmatpush1.msra.mxu0 0.0
        %1072 = vmatprep.subr.mxu0 0.0
        %1073 = vmatpush1.msra.mxu0 0.0
        %1074 = vmatprep.subr.mxu0 0.0
        %1075 = vmatpush1.msra.mxu0 0.0
        %1076 = vmatprep.subr.mxu0 0.0
        %1077 = vmatpush1.msra.mxu0 0.0
        %1078 = vmatprep.subr.mxu0 0.0
        %1079 = vmatpush1.msra.mxu0 0.0
        %1080 = vmatprep.subr.mxu0 0.0
        %1081 = vmatpush1.msra.mxu0 0.0
        %1082 = vmatprep.subr.mxu0 0.0
        %1083 = vmatpush1.msra.mxu0 0.0
        %1084 = vmatprep.subr.mxu0 0.0
        %1085 = vmatpush1.msra.mxu0 0.0
        %1086 = vmatprep.subr.mxu0 0.0
        %1087 = vmatpush1.msra.mxu0 0.0
        %1088 = vmatprep.subr.mxu0 0.0
        %1089 = vmatpush1.msra.mxu0 0.0
        %1090 = vmatprep.subr.mxu0 0.0
        %1091 = vmatpush1.msra.mxu0 0.0
        %1092 = vmatprep.subr.mxu0 0.0
        %1093 = vmatpush1.msra.mxu0 0.0
        %1094 = vmatprep.subr.mxu0 0.0
        %1095 = vmatpush1.msra.mxu0 0.0
        %1096 = vmatprep.subr.mxu0 0.0
        %1097 = vmatpush1.msra.mxu0 0.0
        %1098 = vmatprep.subr.mxu0 0.0
        %1099 = vmatpush1.msra.mxu0 0.0
        %1100 = vmatprep.subr.mxu0 0.0
        %1101 = vmatpush1.msra.mxu0 0.0
        %1102 = vmatprep.subr.mxu0 0.0
        %1103 = vmatpush1.msra.mxu0 0.0
        %1104 = vmatprep.subr.mxu0 0.0
        %1105 = vmatpush1.msra.mxu0 0.0
        %1106 = vmatprep.subr.mxu0 0.0
        %1107 = vmatpush1.msra.mxu0 0.0
        %1108 = vmatprep.subr.mxu0 0.0
        %1109 = vmatpush1.msra.mxu0 0.0
        %1110 = vmatprep.subr.mxu0 0.0
        %1111 = vmatpush1.msra.mxu0 0.0
        %1112 = vmatprep.subr.mxu0 0.0
        %1113 = vmatpush1.msra.mxu0 0.0
        %1114 = vmatprep.subr.mxu0 0.0
        %1115 = vmatpush1.msra.mxu0 0.0
        %1116 = vmatprep.subr.mxu0 0.0
        %1117 = vmatpush1.msra.mxu0 0.0
        %1118 = vmatprep.subr.mxu0 0.0
        %1119 = vmatpush1.msra.mxu0 0.0
        %1120 = vmatprep.subr.mxu0 0.0
        %1121 = vmatpush1.msra.mxu0 0.0
        %1122 = vmatprep.subr.mxu0 0.0
        %1123 = vmatpush1.msra.mxu0 0.0
        %1124 = vmatprep.subr.mxu0 0.0
        %1125 = vmatpush1.msra.mxu0 0.0
        %1126 = vmatprep.mubr.f32.mxu0 0.0
        %1127 = vmatmul.mubr.f32.gmra.mrb[0].mxu0 %v1060
        %v1128 = vpop.f32.mrb[0].mxu0
        %v1129 = vadd.f32 0.0, %v1128
        %v1130 = vpop.f32.mrb[0].mxu0
        %1131 = vdwg.mxu0
        %1132 = vrot.lane.b32.xlu0 %v545, 56
        %v1133 = vpop.permute.xlu0 %1132
        %v1136 = vsel %vm551, %v1055, 0
        %1138 = vmatprep.subr.mxu0 0.0
        %1139 = vmatpush1.msra.mxu0 %v1133
        %1140 = vmatprep.subr.mxu0 0.0
        %1141 = vmatpush1.msra.mxu0 0.0
        %1142 = vmatprep.subr.mxu0 0.0
        %1143 = vmatpush1.msra.mxu0 0.0
        %1144 = vmatprep.subr.mxu0 0.0
        %1145 = vmatpush1.msra.mxu0 0.0
        %1146 = vmatprep.subr.mxu0 0.0
        %1147 = vmatpush1.msra.mxu0 0.0
        %1148 = vmatprep.subr.mxu0 0.0
        %1149 = vmatpush1.msra.mxu0 0.0
        %1150 = vmatprep.subr.mxu0 0.0
        %1151 = vmatpush1.msra.mxu0 0.0
        %1152 = vmatprep.subr.mxu0 0.0
        %1153 = vmatpush1.msra.mxu0 0.0
        %1154 = vmatprep.subr.mxu0 0.0
        %1155 = vmatpush1.msra.mxu0 0.0
        %1156 = vmatprep.subr.mxu0 0.0
        %1157 = vmatpush1.msra.mxu0 0.0
        %1158 = vmatprep.subr.mxu0 0.0
        %1159 = vmatpush1.msra.mxu0 0.0
        %1160 = vmatprep.subr.mxu0 0.0
        %1161 = vmatpush1.msra.mxu0 0.0
        %1162 = vmatprep.subr.mxu0 0.0
        %1163 = vmatpush1.msra.mxu0 0.0
        %1164 = vmatprep.subr.mxu0 0.0
        %1165 = vmatpush1.msra.mxu0 0.0
        %1166 = vmatprep.subr.mxu0 0.0
        %1167 = vmatpush1.msra.mxu0 0.0
        %1168 = vmatprep.subr.mxu0 0.0
        %1169 = vmatpush1.msra.mxu0 0.0
        %1170 = vmatprep.subr.mxu0 0.0
        %1171 = vmatpush1.msra.mxu0 0.0
        %1172 = vmatprep.subr.mxu0 0.0
        %1173 = vmatpush1.msra.mxu0 0.0
        %1174 = vmatprep.subr.mxu0 0.0
        %1175 = vmatpush1.msra.mxu0 0.0
        %1176 = vmatprep.subr.mxu0 0.0
        %1177 = vmatpush1.msra.mxu0 0.0
        %1178 = vmatprep.subr.mxu0 0.0
        %1179 = vmatpush1.msra.mxu0 0.0
        %1180 = vmatprep.subr.mxu0 0.0
        %1181 = vmatpush1.msra.mxu0 0.0
        %1182 = vmatprep.subr.mxu0 0.0
        %1183 = vmatpush1.msra.mxu0 0.0
        %1184 = vmatprep.subr.mxu0 0.0
        %1185 = vmatpush1.msra.mxu0 0.0
        %1186 = vmatprep.subr.mxu0 0.0
        %1187 = vmatpush1.msra.mxu0 0.0
        %1188 = vmatprep.subr.mxu0 0.0
        %1189 = vmatpush1.msra.mxu0 0.0
        %1190 = vmatprep.subr.mxu0 0.0
        %1191 = vmatpush1.msra.mxu0 0.0
        %1192 = vmatprep.subr.mxu0 0.0
        %1193 = vmatpush1.msra.mxu0 0.0
        %1194 = vmatprep.subr.mxu0 0.0
        %1195 = vmatpush1.msra.mxu0 0.0
        %1196 = vmatprep.subr.mxu0 0.0
        %1197 = vmatpush1.msra.mxu0 0.0
        %1198 = vmatprep.subr.mxu0 0.0
        %1199 = vmatpush1.msra.mxu0 0.0
        %1200 = vmatprep.subr.mxu0 0.0
        %1201 = vmatpush1.msra.mxu0 0.0
        %1202 = vmatprep.mubr.f32.mxu0 0.0
        %1203 = vmatmul.mubr.f32.gmra.mrb[0].mxu0 %v1136
        %v1204 = vpop.f32.mrb[0].mxu0
        %v1205 = vadd.f32 0.0, %v1204
        %v1206 = vpop.f32.mrb[0].mxu0
        %1207 = vdwg.mxu0
        %v1208 = vld [vmem:[%s4 + $0x8] sm:$0xff]
        %v1210 = vsel %vm551, %v1129, 0
        %v1213 = vsel %vm551, %v1205, 0
        %1215 = vmatprep.subr.mxu0 0.0
        %1216 = vmatpush1.msra.mxu0 %v1208
        %1217 = vmatprep.subr.mxu0 0.0
        %1218 = vmatpush1.msra.mxu0 0.0
        %1219 = vmatprep.subr.mxu0 0.0
        %1220 = vmatpush1.msra.mxu0 0.0
        %1221 = vmatprep.subr.mxu0 0.0
        %1222 = vmatpush1.msra.mxu0 0.0
        %1223 = vmatprep.subr.mxu0 0.0
        %1224 = vmatpush1.msra.mxu0 0.0
        %1225 = vmatprep.subr.mxu0 0.0
        %1226 = vmatpush1.msra.mxu0 0.0
        %1227 = vmatprep.subr.mxu0 0.0
        %1228 = vmatpush1.msra.mxu0 0.0
        %1229 = vmatprep.subr.mxu0 0.0
        %1230 = vmatpush1.msra.mxu0 0.0
        %1231 = vmatprep.subr.mxu0 0.0
        %1232 = vmatpush1.msra.mxu0 0.0
        %1233 = vmatprep.subr.mxu0 0.0
        %1234 = vmatpush1.msra.mxu0 0.0
        %1235 = vmatprep.subr.mxu0 0.0
        %1236 = vmatpush1.msra.mxu0 0.0
        %1237 = vmatprep.subr.mxu0 0.0
        %1238 = vmatpush1.msra.mxu0 0.0
        %1239 = vmatprep.subr.mxu0 0.0
        %1240 = vmatpush1.msra.mxu0 0.0
        %1241 = vmatprep.subr.mxu0 0.0
        %1242 = vmatpush1.msra.mxu0 0.0
        %1243 = vmatprep.subr.mxu0 0.0
        %1244 = vmatpush1.msra.mxu0 0.0
        %1245 = vmatprep.subr.mxu0 0.0
        %1246 = vmatpush1.msra.mxu0 0.0
        %1247 = vmatprep.subr.mxu0 0.0
        %1248 = vmatpush1.msra.mxu0 0.0
        %1249 = vmatprep.subr.mxu0 0.0
        %1250 = vmatpush1.msra.mxu0 0.0
        %1251 = vmatprep.subr.mxu0 0.0
        %1252 = vmatpush1.msra.mxu0 0.0
        %1253 = vmatprep.subr.mxu0 0.0
        %1254 = vmatpush1.msra.mxu0 0.0
        %1255 = vmatprep.subr.mxu0 0.0
        %1256 = vmatpush1.msra.mxu0 0.0
        %1257 = vmatprep.subr.mxu0 0.0
        %1258 = vmatpush1.msra.mxu0 0.0
        %1259 = vmatprep.subr.mxu0 0.0
        %1260 = vmatpush1.msra.mxu0 0.0
        %1261 = vmatprep.subr.mxu0 0.0
        %1262 = vmatpush1.msra.mxu0 0.0
        %1263 = vmatprep.subr.mxu0 0.0
        %1264 = vmatpush1.msra.mxu0 0.0
        %1265 = vmatprep.subr.mxu0 0.0
        %1266 = vmatpush1.msra.mxu0 0.0
        %1267 = vmatprep.subr.mxu0 0.0
        %1268 = vmatpush1.msra.mxu0 0.0
        %1269 = vmatprep.subr.mxu0 0.0
        %1270 = vmatpush1.msra.mxu0 0.0
        %1271 = vmatprep.subr.mxu0 0.0
        %1272 = vmatpush1.msra.mxu0 0.0
        %1273 = vmatprep.subr.mxu0 0.0
        %1274 = vmatpush1.msra.mxu0 0.0
        %1275 = vmatprep.subr.mxu0 0.0
        %1276 = vmatpush1.msra.mxu0 0.0
        %1277 = vmatprep.subr.mxu0 0.0
        %1278 = vmatpush1.msra.mxu0 0.0
        %1279 = vmatprep.mubr.f32.mxu0 0.0
        %1280 = vmatmul.mubr.f32.gmra.mrb[0].mxu0 %v1210
        %v1281 = vpop.f32.mrb[0].mxu0
        %v1282 = vadd.f32 0.0, %v1281
        %v1283 = vpop.f32.mrb[0].mxu0
        %1284 = vmatprep.mubr.f32.mxu0 0.0
        %1285 = vmatmul.mubr.f32.gmra.mrb[0].mxu0 %v1213
        %v1286 = vpop.f32.mrb[0].mxu0
        %v1287 = vadd.f32 0.0, %v1286
        %v1288 = vpop.f32.mrb[0].mxu0
        %1289 = vdwg.mxu0
        %v1291 = vsel %vm551, %v798, 0
        %v1294 = vsel %vm551, %v874, 0
        %1296 = vmatprep.subr.mxu0 0.0
        %1297 = vmatpush1.msra.mxu0 %v877
        %1298 = vmatprep.subr.mxu0 0.0
        %1299 = vmatpush1.msra.mxu0 0.0
        %1300 = vmatprep.subr.mxu0 0.0
        %1301 = vmatpush1.msra.mxu0 0.0
        %1302 = vmatprep.subr.mxu0 0.0
        %1303 = vmatpush1.msra.mxu0 0.0
        %1304 = vmatprep.subr.mxu0 0.0
        %1305 = vmatpush1.msra.mxu0 0.0
        %1306 = vmatprep.subr.mxu0 0.0
        %1307 = vmatpush1.msra.mxu0 0.0
        %1308 = vmatprep.subr.mxu0 0.0
        %1309 = vmatpush1.msra.mxu0 0.0
        %1310 = vmatprep.subr.mxu0 0.0
        %1311 = vmatpush1.msra.mxu0 0.0
        %1312 = vmatprep.subr.mxu0 0.0
        %1313 = vmatpush1.msra.mxu0 0.0
        %1314 = vmatprep.subr.mxu0 0.0
        %1315 = vmatpush1.msra.mxu0 0.0
        %1316 = vmatprep.subr.mxu0 0.0
        %1317 = vmatpush1.msra.mxu0 0.0
        %1318 = vmatprep.subr.mxu0 0.0
        %1319 = vmatpush1.msra.mxu0 0.0
        %1320 = vmatprep.subr.mxu0 0.0
        %1321 = vmatpush1.msra.mxu0 0.0
        %1322 = vmatprep.subr.mxu0 0.0
        %1323 = vmatpush1.msra.mxu0 0.0
        %1324 = vmatprep.subr.mxu0 0.0
        %1325 = vmatpush1.msra.mxu0 0.0
        %1326 = vmatprep.subr.mxu0 0.0
        %1327 = vmatpush1.msra.mxu0 0.0
        %1328 = vmatprep.subr.mxu0 0.0
        %1329 = vmatpush1.msra.mxu0 0.0
        %1330 = vmatprep.subr.mxu0 0.0
        %1331 = vmatpush1.msra.mxu0 0.0
        %1332 = vmatprep.subr.mxu0 0.0
        %1333 = vmatpush1.msra.mxu0 0.0
        %1334 = vmatprep.subr.mxu0 0.0
        %1335 = vmatpush1.msra.mxu0 0.0
        %1336 = vmatprep.subr.mxu0 0.0
        %1337 = vmatpush1.msra.mxu0 0.0
        %1338 = vmatprep.subr.mxu0 0.0
        %1339 = vmatpush1.msra.mxu0 0.0
        %1340 = vmatprep.subr.mxu0 0.0
        %1341 = vmatpush1.msra.mxu0 0.0
        %1342 = vmatprep.subr.mxu0 0.0
        %1343 = vmatpush1.msra.mxu0 0.0
        %1344 = vmatprep.subr.mxu0 0.0
        %1345 = vmatpush1.msra.mxu0 0.0
        %1346 = vmatprep.subr.mxu0 0.0
        %1347 = vmatpush1.msra.mxu0 0.0
        %1348 = vmatprep.subr.mxu0 0.0
        %1349 = vmatpush1.msra.mxu0 0.0
        %1350 = vmatprep.subr.mxu0 0.0
        %1351 = vmatpush1.msra.mxu0 0.0
        %1352 = vmatprep.subr.mxu0 0.0
        %1353 = vmatpush1.msra.mxu0 0.0
        %1354 = vmatprep.subr.mxu0 0.0
        %1355 = vmatpush1.msra.mxu0 0.0
        %1356 = vmatprep.subr.mxu0 0.0
        %1357 = vmatpush1.msra.mxu0 0.0
        %1358 = vmatprep.subr.mxu0 0.0
        %1359 = vmatpush1.msra.mxu0 0.0
        %1360 = vmatprep.mubr.f32.mxu0 0.0
        %1361 = vmatmul.mubr.f32.gmra.mrb[0].mxu0 %v1291
        %v1362 = vpop.f32.mrb[0].mxu0
        %v1363 = vadd.f32 %v1282, %v1362
        %v1364 = vpop.f32.mrb[0].mxu0
        %1365 = vmatprep.mubr.f32.mxu0 0.0
        %1366 = vmatmul.mubr.f32.gmra.mrb[0].mxu0 %v1294
        %v1367 = vpop.f32.mrb[0].mxu0
        %v1368 = vadd.f32 %v1287, %v1367
        %v1369 = vpop.f32.mrb[0].mxu0
        %1370 = vdwg.mxu0
        %1371 = vrot.lane.b32.xlu0 %v540, 112
        %v1372 = vpop.permute.xlu0 %1371
        %1373 = vrot.lane.b32.xlu0 %v540, 80
        %v1374 = vpop.permute.xlu0 %1373
        %v1375 = vsel %vm551, %v1372, 0
        %v1377 = vsel %vm551, %v1374, 0
        %1379 = vmatprep.subr.mxu0 0.0
        %1380 = vmatpush1.xpose.msra.mxu0 %v1377
        %1381 = vmatprep.subr.mxu0 0.0
        %1382 = vmatpush1.xpose.msra.mxu0 0.0
        %1383 = vmatprep.subr.mxu0 0.0
        %1384 = vmatpush1.xpose.msra.mxu0 0.0
        %1385 = vmatprep.subr.mxu0 0.0
        %1386 = vmatpush1.xpose.msra.mxu0 0.0
        %1387 = vmatprep.subr.mxu0 0.0
        %1388 = vmatpush1.xpose.msra.mxu0 0.0
        %1389 = vmatprep.subr.mxu0 0.0
        %1390 = vmatpush1.xpose.msra.mxu0 0.0
        %1391 = vmatprep.subr.mxu0 0.0
        %1392 = vmatpush1.xpose.msra.mxu0 0.0
        %1393 = vmatprep.subr.mxu0 0.0
        %1394 = vmatpush1.xpose.msra.mxu0 0.0
        %1395 = vmatprep.subr.mxu0 0.0
        %1396 = vmatpush1.xpose.msra.mxu0 0.0
        %1397 = vmatprep.subr.mxu0 0.0
        %1398 = vmatpush1.xpose.msra.mxu0 0.0
        %1399 = vmatprep.subr.mxu0 0.0
        %1400 = vmatpush1.xpose.msra.mxu0 0.0
        %1401 = vmatprep.subr.mxu0 0.0
        %1402 = vmatpush1.xpose.msra.mxu0 0.0
        %1403 = vmatprep.subr.mxu0 0.0
        %1404 = vmatpush1.xpose.msra.mxu0 0.0
        %1405 = vmatprep.subr.mxu0 0.0
        %1406 = vmatpush1.xpose.msra.mxu0 0.0
        %1407 = vmatprep.subr.mxu0 0.0
        %1408 = vmatpush1.xpose.msra.mxu0 0.0
        %1409 = vmatprep.subr.mxu0 0.0
        %1410 = vmatpush1.xpose.msra.mxu0 0.0
        %1411 = vmatprep.subr.mxu0 0.0
        %1412 = vmatpush1.xpose.msra.mxu0 0.0
        %1413 = vmatprep.subr.mxu0 0.0
        %1414 = vmatpush1.xpose.msra.mxu0 0.0
        %1415 = vmatprep.subr.mxu0 0.0
        %1416 = vmatpush1.xpose.msra.mxu0 0.0
        %1417 = vmatprep.subr.mxu0 0.0
        %1418 = vmatpush1.xpose.msra.mxu0 0.0
        %1419 = vmatprep.subr.mxu0 0.0
        %1420 = vmatpush1.xpose.msra.mxu0 0.0
        %1421 = vmatprep.subr.mxu0 0.0
        %1422 = vmatpush1.xpose.msra.mxu0 0.0
        %1423 = vmatprep.subr.mxu0 0.0
        %1424 = vmatpush1.xpose.msra.mxu0 0.0
        %1425 = vmatprep.subr.mxu0 0.0
        %1426 = vmatpush1.xpose.msra.mxu0 0.0
        %1427 = vmatprep.subr.mxu0 0.0
        %1428 = vmatpush1.xpose.msra.mxu0 0.0
        %1429 = vmatprep.subr.mxu0 0.0
        %1430 = vmatpush1.xpose.msra.mxu0 0.0
        %1431 = vmatprep.subr.mxu0 0.0
        %1432 = vmatpush1.xpose.msra.mxu0 0.0
        %1433 = vmatprep.subr.mxu0 0.0
        %1434 = vmatpush1.xpose.msra.mxu0 0.0
        %1435 = vmatprep.subr.mxu0 0.0
        %1436 = vmatpush1.xpose.msra.mxu0 0.0
        %1437 = vmatprep.subr.mxu0 0.0
        %1438 = vmatpush1.xpose.msra.mxu0 0.0
        %1439 = vmatprep.subr.mxu0 0.0
        %1440 = vmatpush1.xpose.msra.mxu0 0.0
        %1441 = vmatprep.subr.mxu0 0.0
        %1442 = vmatpush1.xpose.msra.mxu0 0.0
        %1443 = vmatprep.mubr.f32.mxu0 0.0
        %1444 = vmatmul.mubr.f32.gmra.mrb[0].mxu0 %v1375
        %v1445 = vpop.f32.mrb[0].mxu0
        %v1446 = vadd.f32 0.0, %v1445
        %v1447 = vpop.f32.mrb[0].mxu0
        %1448 = vdwg.mxu0
        %1449 = vrot.lane.b32.xlu0 %v545, 112
        %v1450 = vpop.permute.xlu0 %1449
        %1451 = vrot.lane.b32.xlu0 %v545, 80
        %v1452 = vpop.permute.xlu0 %1451
        %v1453 = vsel %vm551, %v1450, 0
        %v1455 = vsel %vm551, %v1452, 0
        %1457 = vmatprep.subr.mxu0 0.0
        %1458 = vmatpush1.xpose.msra.mxu0 %v1455
        %1459 = vmatprep.subr.mxu0 0.0
        %1460 = vmatpush1.xpose.msra.mxu0 0.0
        %1461 = vmatprep.subr.mxu0 0.0
        %1462 = vmatpush1.xpose.msra.mxu0 0.0
        %1463 = vmatprep.subr.mxu0 0.0
        %1464 = vmatpush1.xpose.msra.mxu0 0.0
        %1465 = vmatprep.subr.mxu0 0.0
        %1466 = vmatpush1.xpose.msra.mxu0 0.0
        %1467 = vmatprep.subr.mxu0 0.0
        %1468 = vmatpush1.xpose.msra.mxu0 0.0
        %1469 = vmatprep.subr.mxu0 0.0
        %1470 = vmatpush1.xpose.msra.mxu0 0.0
        %1471 = vmatprep.subr.mxu0 0.0
        %1472 = vmatpush1.xpose.msra.mxu0 0.0
        %1473 = vmatprep.subr.mxu0 0.0
        %1474 = vmatpush1.xpose.msra.mxu0 0.0
        %1475 = vmatprep.subr.mxu0 0.0
        %1476 = vmatpush1.xpose.msra.mxu0 0.0
        %1477 = vmatprep.subr.mxu0 0.0
        %1478 = vmatpush1.xpose.msra.mxu0 0.0
        %1479 = vmatprep.subr.mxu0 0.0
        %1480 = vmatpush1.xpose.msra.mxu0 0.0
        %1481 = vmatprep.subr.mxu0 0.0
        %1482 = vmatpush1.xpose.msra.mxu0 0.0
        %1483 = vmatprep.subr.mxu0 0.0
        %1484 = vmatpush1.xpose.msra.mxu0 0.0
        %1485 = vmatprep.subr.mxu0 0.0
        %1486 = vmatpush1.xpose.msra.mxu0 0.0
        %1487 = vmatprep.subr.mxu0 0.0
        %1488 = vmatpush1.xpose.msra.mxu0 0.0
        %1489 = vmatprep.subr.mxu0 0.0
        %1490 = vmatpush1.xpose.msra.mxu0 0.0
        %1491 = vmatprep.subr.mxu0 0.0
        %1492 = vmatpush1.xpose.msra.mxu0 0.0
        %1493 = vmatprep.subr.mxu0 0.0
        %1494 = vmatpush1.xpose.msra.mxu0 0.0
        %1495 = vmatprep.subr.mxu0 0.0
        %1496 = vmatpush1.xpose.msra.mxu0 0.0
        %1497 = vmatprep.subr.mxu0 0.0
        %1498 = vmatpush1.xpose.msra.mxu0 0.0
        %1499 = vmatprep.subr.mxu0 0.0
        %1500 = vmatpush1.xpose.msra.mxu0 0.0
        %1501 = vmatprep.subr.mxu0 0.0
        %1502 = vmatpush1.xpose.msra.mxu0 0.0
        %1503 = vmatprep.subr.mxu0 0.0
        %1504 = vmatpush1.xpose.msra.mxu0 0.0
        %1505 = vmatprep.subr.mxu0 0.0
        %1506 = vmatpush1.xpose.msra.mxu0 0.0
        %1507 = vmatprep.subr.mxu0 0.0
        %1508 = vmatpush1.xpose.msra.mxu0 0.0
        %1509 = vmatprep.subr.mxu0 0.0
        %1510 = vmatpush1.xpose.msra.mxu0 0.0
        %1511 = vmatprep.subr.mxu0 0.0
        %1512 = vmatpush1.xpose.msra.mxu0 0.0
        %1513 = vmatprep.subr.mxu0 0.0
        %1514 = vmatpush1.xpose.msra.mxu0 0.0
        %1515 = vmatprep.subr.mxu0 0.0
        %1516 = vmatpush1.xpose.msra.mxu0 0.0
        %1517 = vmatprep.subr.mxu0 0.0
        %1518 = vmatpush1.xpose.msra.mxu0 0.0
        %1519 = vmatprep.subr.mxu0 0.0
        %1520 = vmatpush1.xpose.msra.mxu0 0.0
        %1521 = vmatprep.mubr.f32.mxu0 0.0
        %1522 = vmatmul.mubr.f32.gmra.mrb[0].mxu0 %v1453
        %v1523 = vpop.f32.mrb[0].mxu0
        %v1524 = vadd.f32 0.0, %v1523
        %v1525 = vpop.f32.mrb[0].mxu0
        %1526 = vdwg.mxu0
        %v1527 = vsel %vm551, %v1446, -inf
        %1528 = vmax.xlane.f32.xlu0 %v1527
        %v1529 = vpop.xlane.xlu0 %1528
        %v1530 = vsel %vm551, %v1524, -inf
        %1531 = vmax.xlane.f32.xlu0 %v1530
        %v1532 = vpop.xlane.xlu0 %1531
        %v1533 = vsub.f32 %v1446, %v1529
        %v1534 = vsub.f32 %v1524, %v1532
        %v1535 = vmul.f32 %v1533, 1.442695
        %v1536 = vpow.pop %v1535
        %v1537 = vmul.f32 %v1534, 1.442695
        %v1538 = vpow.pop %v1537
        %v1539 = vsel %vm551, %v1536, 0.0
        %1540 = vadd.xlane.f32.xlu0 %v1539
        %v1541 = vpop.xlane.xlu0 %1540
        %v1542 = vsel %vm551, %v1538, 0.0
        %1543 = vadd.xlane.f32.xlu0 %v1542
        %v1544 = vpop.xlane.xlu0 %1543
        %v1545 = vrcp.pop %v1541
        %v1546 = vrcp.pop %v1544
        %v1547 = vmul.f32 %v1536, %v1545
        %v1548 = vmul.f32 %v1538, %v1546
        %1549 = vrot.lane.b32.xlu0 %v540, 48
        %v1550 = vpop.permute.xlu0 %1549
        %v1553 = vsel %vm551, %v1547, 0
        %1555 = vmatprep.subr.mxu0 0.0
        %1556 = vmatpush1.msra.mxu0 %v1550
        %1557 = vmatprep.subr.mxu0 0.0
        %1558 = vmatpush1.msra.mxu0 0.0
        %1559 = vmatprep.subr.mxu0 0.0
        %1560 = vmatpush1.msra.mxu0 0.0
        %1561 = vmatprep.subr.mxu0 0.0
        %1562 = vmatpush1.msra.mxu0 0.0
        %1563 = vmatprep.subr.mxu0 0.0
        %1564 = vmatpush1.msra.mxu0 0.0
        %1565 = vmatprep.subr.mxu0 0.0
        %1566 = vmatpush1.msra.mxu0 0.0
        %1567 = vmatprep.subr.mxu0 0.0
        %1568 = vmatpush1.msra.mxu0 0.0
        %1569 = vmatprep.subr.mxu0 0.0
        %1570 = vmatpush1.msra.mxu0 0.0
        %1571 = vmatprep.subr.mxu0 0.0
        %1572 = vmatpush1.msra.mxu0 0.0
        %1573 = vmatprep.subr.mxu0 0.0
        %1574 = vmatpush1.msra.mxu0 0.0
        %1575 = vmatprep.subr.mxu0 0.0
        %1576 = vmatpush1.msra.mxu0 0.0
        %1577 = vmatprep.subr.mxu0 0.0
        %1578 = vmatpush1.msra.mxu0 0.0
        %1579 = vmatprep.subr.mxu0 0.0
        %1580 = vmatpush1.msra.mxu0 0.0
        %1581 = vmatprep.subr.mxu0 0.0
        %1582 = vmatpush1.msra.mxu0 0.0
        %1583 = vmatprep.subr.mxu0 0.0
        %1584 = vmatpush1.msra.mxu0 0.0
        %1585 = vmatprep.subr.mxu0 0.0
        %1586 = vmatpush1.msra.mxu0 0.0
        %1587 = vmatprep.subr.mxu0 0.0
        %1588 = vmatpush1.msra.mxu0 0.0
        %1589 = vmatprep.subr.mxu0 0.0
        %1590 = vmatpush1.msra.mxu0 0.0
        %1591 = vmatprep.subr.mxu0 0.0
        %1592 = vmatpush1.msra.mxu0 0.0
        %1593 = vmatprep.subr.mxu0 0.0
        %1594 = vmatpush1.msra.mxu0 0.0
        %1595 = vmatprep.subr.mxu0 0.0
        %1596 = vmatpush1.msra.mxu0 0.0
        %1597 = vmatprep.subr.mxu0 0.0
        %1598 = vmatpush1.msra.mxu0 0.0
        %1599 = vmatprep.subr.mxu0 0.0
        %1600 = vmatpush1.msra.mxu0 0.0
        %1601 = vmatprep.subr.mxu0 0.0
        %1602 = vmatpush1.msra.mxu0 0.0
        %1603 = vmatprep.subr.mxu0 0.0
        %1604 = vmatpush1.msra.mxu0 0.0
        %1605 = vmatprep.subr.mxu0 0.0
        %1606 = vmatpush1.msra.mxu0 0.0
        %1607 = vmatprep.subr.mxu0 0.0
        %1608 = vmatpush1.msra.mxu0 0.0
        %1609 = vmatprep.subr.mxu0 0.0
        %1610 = vmatpush1.msra.mxu0 0.0
        %1611 = vmatprep.subr.mxu0 0.0
        %1612 = vmatpush1.msra.mxu0 0.0
        %1613 = vmatprep.subr.mxu0 0.0
        %1614 = vmatpush1.msra.mxu0 0.0
        %1615 = vmatprep.subr.mxu0 0.0
        %1616 = vmatpush1.msra.mxu0 0.0
        %1617 = vmatprep.subr.mxu0 0.0
        %1618 = vmatpush1.msra.mxu0 0.0
        %1619 = vmatprep.mubr.f32.mxu0 0.0
        %1620 = vmatmul.mubr.f32.gmra.mrb[0].mxu0 %v1553
        %v1621 = vpop.f32.mrb[0].mxu0
        %v1622 = vadd.f32 0.0, %v1621
        %v1623 = vpop.f32.mrb[0].mxu0
        %1624 = vdwg.mxu0
        %1625 = vrot.lane.b32.xlu0 %v545, 48
        %v1626 = vpop.permute.xlu0 %1625
        %v1629 = vsel %vm551, %v1548, 0
        %1631 = vmatprep.subr.mxu0 0.0
        %1632 = vmatpush1.msra.mxu0 %v1626
        %1633 = vmatprep.subr.mxu0 0.0
        %1634 = vmatpush1.msra.mxu0 0.0
        %1635 = vmatprep.subr.mxu0 0.0
        %1636 = vmatpush1.msra.mxu0 0.0
        %1637 = vmatprep.subr.mxu0 0.0
        %1638 = vmatpush1.msra.mxu0 0.0
        %1639 = vmatprep.subr.mxu0 0.0
        %1640 = vmatpush1.msra.mxu0 0.0
        %1641 = vmatprep.subr.mxu0 0.0
        %1642 = vmatpush1.msra.mxu0 0.0
        %1643 = vmatprep.subr.mxu0 0.0
        %1644 = vmatpush1.msra.mxu0 0.0
        %1645 = vmatprep.subr.mxu0 0.0
        %1646 = vmatpush1.msra.mxu0 0.0
        %1647 = vmatprep.subr.mxu0 0.0
        %1648 = vmatpush1.msra.mxu0 0.0
        %1649 = vmatprep.subr.mxu0 0.0
        %1650 = vmatpush1.msra.mxu0 0.0
        %1651 = vmatprep.subr.mxu0 0.0
        %1652 = vmatpush1.msra.mxu0 0.0
        %1653 = vmatprep.subr.mxu0 0.0
        %1654 = vmatpush1.msra.mxu0 0.0
        %1655 = vmatprep.subr.mxu0 0.0
        %1656 = vmatpush1.msra.mxu0 0.0
        %1657 = vmatprep.subr.mxu0 0.0
        %1658 = vmatpush1.msra.mxu0 0.0
        %1659 = vmatprep.subr.mxu0 0.0
        %1660 = vmatpush1.msra.mxu0 0.0
        %1661 = vmatprep.subr.mxu0 0.0
        %1662 = vmatpush1.msra.mxu0 0.0
        %1663 = vmatprep.subr.mxu0 0.0
        %1664 = vmatpush1.msra.mxu0 0.0
        %1665 = vmatprep.subr.mxu0 0.0
        %1666 = vmatpush1.msra.mxu0 0.0
        %1667 = vmatprep.subr.mxu0 0.0
        %1668 = vmatpush1.msra.mxu0 0.0
        %1669 = vmatprep.subr.mxu0 0.0
        %1670 = vmatpush1.msra.mxu0 0.0
        %1671 = vmatprep.subr.mxu0 0.0
        %1672 = vmatpush1.msra.mxu0 0.0
        %1673 = vmatprep.subr.mxu0 0.0
        %1674 = vmatpush1.msra.mxu0 0.0
        %1675 = vmatprep.subr.mxu0 0.0
        %1676 = vmatpush1.msra.mxu0 0.0
        %1677 = vmatprep.subr.mxu0 0.0
        %1678 = vmatpush1.msra.mxu0 0.0
        %1679 = vmatprep.subr.mxu0 0.0
        %1680 = vmatpush1.msra.mxu0 0.0
        %1681 = vmatprep.subr.mxu0 0.0
        %1682 = vmatpush1.msra.mxu0 0.0
        %1683 = vmatprep.subr.mxu0 0.0
        %1684 = vmatpush1.msra.mxu0 0.0
        %1685 = vmatprep.subr.mxu0 0.0
        %1686 = vmatpush1.msra.mxu0 0.0
        %1687 = vmatprep.subr.mxu0 0.0
        %1688 = vmatpush1.msra.mxu0 0.0
        %1689 = vmatprep.subr.mxu0 0.0
        %1690 = vmatpush1.msra.mxu0 0.0
        %1691 = vmatprep.subr.mxu0 0.0
        %1692 = vmatpush1.msra.mxu0 0.0
        %1693 = vmatprep.subr.mxu0 0.0
        %1694 = vmatpush1.msra.mxu0 0.0
        %1695 = vmatprep.mubr.f32.mxu0 0.0
        %1696 = vmatmul.mubr.f32.gmra.mrb[0].mxu0 %v1629
        %v1697 = vpop.f32.mrb[0].mxu0
        %v1698 = vadd.f32 0.0, %v1697
        %v1699 = vpop.f32.mrb[0].mxu0
        %1700 = vdwg.mxu0
        %v1701 = vld [vmem:[%s4 + $0x10] sm:$0xff]
        %v1703 = vsel %vm551, %v1622, 0
        %v1706 = vsel %vm551, %v1698, 0
        %1708 = vmatprep.subr.mxu0 0.0
        %1709 = vmatpush1.msra.mxu0 %v1701
        %1710 = vmatprep.subr.mxu0 0.0
        %1711 = vmatpush1.msra.mxu0 0.0
        %1712 = vmatprep.subr.mxu0 0.0
        %1713 = vmatpush1.msra.mxu0 0.0
        %1714 = vmatprep.subr.mxu0 0.0
        %1715 = vmatpush1.msra.mxu0 0.0
        %1716 = vmatprep.subr.mxu0 0.0
        %1717 = vmatpush1.msra.mxu0 0.0
        %1718 = vmatprep.subr.mxu0 0.0
        %1719 = vmatpush1.msra.mxu0 0.0
        %1720 = vmatprep.subr.mxu0 0.0
        %1721 = vmatpush1.msra.mxu0 0.0
        %1722 = vmatprep.subr.mxu0 0.0
        %1723 = vmatpush1.msra.mxu0 0.0
        %1724 = vmatprep.subr.mxu0 0.0
        %1725 = vmatpush1.msra.mxu0 0.0
        %1726 = vmatprep.subr.mxu0 0.0
        %1727 = vmatpush1.msra.mxu0 0.0
        %1728 = vmatprep.subr.mxu0 0.0
        %1729 = vmatpush1.msra.mxu0 0.0
        %1730 = vmatprep.subr.mxu0 0.0
        %1731 = vmatpush1.msra.mxu0 0.0
        %1732 = vmatprep.subr.mxu0 0.0
        %1733 = vmatpush1.msra.mxu0 0.0
        %1734 = vmatprep.subr.mxu0 0.0
        %1735 = vmatpush1.msra.mxu0 0.0
        %1736 = vmatprep.subr.mxu0 0.0
        %1737 = vmatpush1.msra.mxu0 0.0
        %1738 = vmatprep.subr.mxu0 0.0
        %1739 = vmatpush1.msra.mxu0 0.0
        %1740 = vmatprep.subr.mxu0 0.0
        %1741 = vmatpush1.msra.mxu0 0.0
        %1742 = vmatprep.subr.mxu0 0.0
        %1743 = vmatpush1.msra.mxu0 0.0
        %1744 = vmatprep.subr.mxu0 0.0
        %1745 = vmatpush1.msra.mxu0 0.0
        %1746 = vmatprep.subr.mxu0 0.0
        %1747 = vmatpush1.msra.mxu0 0.0
        %1748 = vmatprep.subr.mxu0 0.0
        %1749 = vmatpush1.msra.mxu0 0.0
        %1750 = vmatprep.subr.mxu0 0.0
        %1751 = vmatpush1.msra.mxu0 0.0
        %1752 = vmatprep.subr.mxu0 0.0
        %1753 = vmatpush1.msra.mxu0 0.0
        %1754 = vmatprep.subr.mxu0 0.0
        %1755 = vmatpush1.msra.mxu0 0.0
        %1756 = vmatprep.subr.mxu0 0.0
        %1757 = vmatpush1.msra.mxu0 0.0
        %1758 = vmatprep.subr.mxu0 0.0
        %1759 = vmatpush1.msra.mxu0 0.0
        %1760 = vmatprep.subr.mxu0 0.0
        %1761 = vmatpush1.msra.mxu0 0.0
        %1762 = vmatprep.subr.mxu0 0.0
        %1763 = vmatpush1.msra.mxu0 0.0
        %1764 = vmatprep.subr.mxu0 0.0
        %1765 = vmatpush1.msra.mxu0 0.0
        %1766 = vmatprep.subr.mxu0 0.0
        %1767 = vmatpush1.msra.mxu0 0.0
        %1768 = vmatprep.subr.mxu0 0.0
        %1769 = vmatpush1.msra.mxu0 0.0
        %1770 = vmatprep.subr.mxu0 0.0
        %1771 = vmatpush1.msra.mxu0 0.0
        %1772 = vmatprep.mubr.f32.mxu0 0.0
        %1773 = vmatmul.mubr.f32.gmra.mrb[0].mxu0 %v1703
        %v1774 = vpop.f32.mrb[0].mxu0
        %v1775 = vadd.f32 0.0, %v1774
        %v1776 = vpop.f32.mrb[0].mxu0
        %1777 = vmatprep.mubr.f32.mxu0 0.0
        %1778 = vmatmul.mubr.f32.gmra.mrb[0].mxu0 %v1706
        %v1779 = vpop.f32.mrb[0].mxu0
        %v1780 = vadd.f32 0.0, %v1779
        %v1781 = vpop.f32.mrb[0].mxu0
        %1782 = vdwg.mxu0
        %v1783 = vadd.f32 %v1363, %v1775
        %v1784 = vadd.f32 %v1368, %v1780
        %1785 = vrot.lane.b32.xlu0 %v540, 104
        %v1786 = vpop.permute.xlu0 %1785
        %1787 = vrot.lane.b32.xlu0 %v540, 72
        %v1788 = vpop.permute.xlu0 %1787
        %v1789 = vsel %vm551, %v1786, 0
        %v1791 = vsel %vm551, %v1788, 0
        %1793 = vmatprep.subr.mxu0 0.0
        %1794 = vmatpush1.xpose.msra.mxu0 %v1791
        %1795 = vmatprep.subr.mxu0 0.0
        %1796 = vmatpush1.xpose.msra.mxu0 0.0
        %1797 = vmatprep.subr.mxu0 0.0
        %1798 = vmatpush1.xpose.msra.mxu0 0.0
        %1799 = vmatprep.subr.mxu0 0.0
        %1800 = vmatpush1.xpose.msra.mxu0 0.0
        %1801 = vmatprep.subr.mxu0 0.0
        %1802 = vmatpush1.xpose.msra.mxu0 0.0
        %1803 = vmatprep.subr.mxu0 0.0
        %1804 = vmatpush1.xpose.msra.mxu0 0.0
        %1805 = vmatprep.subr.mxu0 0.0
        %1806 = vmatpush1.xpose.msra.mxu0 0.0
        %1807 = vmatprep.subr.mxu0 0.0
        %1808 = vmatpush1.xpose.msra.mxu0 0.0
        %1809 = vmatprep.subr.mxu0 0.0
        %1810 = vmatpush1.xpose.msra.mxu0 0.0
        %1811 = vmatprep.subr.mxu0 0.0
        %1812 = vmatpush1.xpose.msra.mxu0 0.0
        %1813 = vmatprep.subr.mxu0 0.0
        %1814 = vmatpush1.xpose.msra.mxu0 0.0
        %1815 = vmatprep.subr.mxu0 0.0
        %1816 = vmatpush1.xpose.msra.mxu0 0.0
        %1817 = vmatprep.subr.mxu0 0.0
        %1818 = vmatpush1.xpose.msra.mxu0 0.0
        %1819 = vmatprep.subr.mxu0 0.0
        %1820 = vmatpush1.xpose.msra.mxu0 0.0
        %1821 = vmatprep.subr.mxu0 0.0
        %1822 = vmatpush1.xpose.msra.mxu0 0.0
        %1823 = vmatprep.subr.mxu0 0.0
        %1824 = vmatpush1.xpose.msra.mxu0 0.0
        %1825 = vmatprep.subr.mxu0 0.0
        %1826 = vmatpush1.xpose.msra.mxu0 0.0
        %1827 = vmatprep.subr.mxu0 0.0
        %1828 = vmatpush1.xpose.msra.mxu0 0.0
        %1829 = vmatprep.subr.mxu0 0.0
        %1830 = vmatpush1.xpose.msra.mxu0 0.0
        %1831 = vmatprep.subr.mxu0 0.0
        %1832 = vmatpush1.xpose.msra.mxu0 0.0
        %1833 = vmatprep.subr.mxu0 0.0
        %1834 = vmatpush1.xpose.msra.mxu0 0.0
        %1835 = vmatprep.subr.mxu0 0.0
        %1836 = vmatpush1.xpose.msra.mxu0 0.0
        %1837 = vmatprep.subr.mxu0 0.0
        %1838 = vmatpush1.xpose.msra.mxu0 0.0
        %1839 = vmatprep.subr.mxu0 0.0
        %1840 = vmatpush1.xpose.msra.mxu0 0.0
        %1841 = vmatprep.subr.mxu0 0.0
        %1842 = vmatpush1.xpose.msra.mxu0 0.0
        %1843 = vmatprep.subr.mxu0 0.0
        %1844 = vmatpush1.xpose.msra.mxu0 0.0
        %1845 = vmatprep.subr.mxu0 0.0
        %1846 = vmatpush1.xpose.msra.mxu0 0.0
        %1847 = vmatprep.subr.mxu0 0.0
        %1848 = vmatpush1.xpose.msra.mxu0 0.0
        %1849 = vmatprep.subr.mxu0 0.0
        %1850 = vmatpush1.xpose.msra.mxu0 0.0
        %1851 = vmatprep.subr.mxu0 0.0
        %1852 = vmatpush1.xpose.msra.mxu0 0.0
        %1853 = vmatprep.subr.mxu0 0.0
        %1854 = vmatpush1.xpose.msra.mxu0 0.0
        %1855 = vmatprep.subr.mxu0 0.0
        %1856 = vmatpush1.xpose.msra.mxu0 0.0
        %1857 = vmatprep.mubr.f32.mxu0 0.0
        %1858 = vmatmul.mubr.f32.gmra.mrb[0].mxu0 %v1789
        %v1859 = vpop.f32.mrb[0].mxu0
        %v1860 = vadd.f32 0.0, %v1859
        %v1861 = vpop.f32.mrb[0].mxu0
        %1862 = vdwg.mxu0
        %1863 = vrot.lane.b32.xlu0 %v545, 104
        %v1864 = vpop.permute.xlu0 %1863
        %1865 = vrot.lane.b32.xlu0 %v545, 72
        %v1866 = vpop.permute.xlu0 %1865
        %v1867 = vsel %vm551, %v1864, 0
        %v1869 = vsel %vm551, %v1866, 0
        %1871 = vmatprep.subr.mxu0 0.0
        %1872 = vmatpush1.xpose.msra.mxu0 %v1869
        %1873 = vmatprep.subr.mxu0 0.0
        %1874 = vmatpush1.xpose.msra.mxu0 0.0
        %1875 = vmatprep.subr.mxu0 0.0
        %1876 = vmatpush1.xpose.msra.mxu0 0.0
        %1877 = vmatprep.subr.mxu0 0.0
        %1878 = vmatpush1.xpose.msra.mxu0 0.0
        %1879 = vmatprep.subr.mxu0 0.0
        %1880 = vmatpush1.xpose.msra.mxu0 0.0
        %1881 = vmatprep.subr.mxu0 0.0
        %1882 = vmatpush1.xpose.msra.mxu0 0.0
        %1883 = vmatprep.subr.mxu0 0.0
        %1884 = vmatpush1.xpose.msra.mxu0 0.0
        %1885 = vmatprep.subr.mxu0 0.0
        %1886 = vmatpush1.xpose.msra.mxu0 0.0
        %1887 = vmatprep.subr.mxu0 0.0
        %1888 = vmatpush1.xpose.msra.mxu0 0.0
        %1889 = vmatprep.subr.mxu0 0.0
        %1890 = vmatpush1.xpose.msra.mxu0 0.0
        %1891 = vmatprep.subr.mxu0 0.0
        %1892 = vmatpush1.xpose.msra.mxu0 0.0
        %1893 = vmatprep.subr.mxu0 0.0
        %1894 = vmatpush1.xpose.msra.mxu0 0.0
        %1895 = vmatprep.subr.mxu0 0.0
        %1896 = vmatpush1.xpose.msra.mxu0 0.0
        %1897 = vmatprep.subr.mxu0 0.0
        %1898 = vmatpush1.xpose.msra.mxu0 0.0
        %1899 = vmatprep.subr.mxu0 0.0
        %1900 = vmatpush1.xpose.msra.mxu0 0.0
        %1901 = vmatprep.subr.mxu0 0.0
        %1902 = vmatpush1.xpose.msra.mxu0 0.0
        %1903 = vmatprep.subr.mxu0 0.0
        %1904 = vmatpush1.xpose.msra.mxu0 0.0
        %1905 = vmatprep.subr.mxu0 0.0
        %1906 = vmatpush1.xpose.msra.mxu0 0.0
        %1907 = vmatprep.subr.mxu0 0.0
        %1908 = vmatpush1.xpose.msra.mxu0 0.0
        %1909 = vmatprep.subr.mxu0 0.0
        %1910 = vmatpush1.xpose.msra.mxu0 0.0
        %1911 = vmatprep.subr.mxu0 0.0
        %1912 = vmatpush1.xpose.msra.mxu0 0.0
        %1913 = vmatprep.subr.mxu0 0.0
        %1914 = vmatpush1.xpose.msra.mxu0 0.0
        %1915 = vmatprep.subr.mxu0 0.0
        %1916 = vmatpush1.xpose.msra.mxu0 0.0
        %1917 = vmatprep.subr.mxu0 0.0
        %1918 = vmatpush1.xpose.msra.mxu0 0.0
        %1919 = vmatprep.subr.mxu0 0.0
        %1920 = vmatpush1.xpose.msra.mxu0 0.0
        %1921 = vmatprep.subr.mxu0 0.0
        %1922 = vmatpush1.xpose.msra.mxu0 0.0
        %1923 = vmatprep.subr.mxu0 0.0
        %1924 = vmatpush1.xpose.msra.mxu0 0.0
        %1925 = vmatprep.subr.mxu0 0.0
        %1926 = vmatpush1.xpose.msra.mxu0 0.0
        %1927 = vmatprep.subr.mxu0 0.0
        %1928 = vmatpush1.xpose.msra.mxu0 0.0
        %1929 = vmatprep.subr.mxu0 0.0
        %1930 = vmatpush1.xpose.msra.mxu0 0.0
        %1931 = vmatprep.subr.mxu0 0.0
        %1932 = vmatpush1.xpose.msra.mxu0 0.0
        %1933 = vmatprep.subr.mxu0 0.0
        %1934 = vmatpush1.xpose.msra.mxu0 0.0
        %1935 = vmatprep.mubr.f32.mxu0 0.0
        %1936 = vmatmul.mubr.f32.gmra.mrb[0].mxu0 %v1867
        %v1937 = vpop.f32.mrb[0].mxu0
        %v1938 = vadd.f32 0.0, %v1937
        %v1939 = vpop.f32.mrb[0].mxu0
        %1940 = vdwg.mxu0
        %v1941 = vsel %vm551, %v1860, -inf
        %1942 = vmax.xlane.f32.xlu0 %v1941
        %v1943 = vpop.xlane.xlu0 %1942
        %v1944 = vsel %vm551, %v1938, -inf
        %1945 = vmax.xlane.f32.xlu0 %v1944
        %v1946 = vpop.xlane.xlu0 %1945
        %v1947 = vsub.f32 %v1860, %v1943
        %v1948 = vsub.f32 %v1938, %v1946
        %v1949 = vmul.f32 %v1947, 1.442695
        %v1950 = vpow.pop %v1949
        %v1951 = vmul.f32 %v1948, 1.442695
        %v1952 = vpow.pop %v1951
        %v1953 = vsel %vm551, %v1950, 0.0
        %1954 = vadd.xlane.f32.xlu0 %v1953
        %v1955 = vpop.xlane.xlu0 %1954
        %v1956 = vsel %vm551, %v1952, 0.0
        %1957 = vadd.xlane.f32.xlu0 %v1956
        %v1958 = vpop.xlane.xlu0 %1957
        %v1959 = vrcp.pop %v1955
        %v1960 = vrcp.pop %v1958
        %v1961 = vmul.f32 %v1950, %v1959
        %v1962 = vmul.f32 %v1952, %v1960
        %1963 = vrot.lane.b32.xlu0 %v540, 40
        %v1964 = vpop.permute.xlu0 %1963
        %v1967 = vsel %vm551, %v1961, 0
        %1969 = vmatprep.subr.mxu0 0.0
        %1970 = vmatpush1.msra.mxu0 %v1964
        %1971 = vmatprep.subr.mxu0 0.0
        %1972 = vmatpush1.msra.mxu0 0.0
        %1973 = vmatprep.subr.mxu0 0.0
        %1974 = vmatpush1.msra.mxu0 0.0
        %1975 = vmatprep.subr.mxu0 0.0
        %1976 = vmatpush1.msra.mxu0 0.0
        %1977 = vmatprep.subr.mxu0 0.0
        %1978 = vmatpush1.msra.mxu0 0.0
        %1979 = vmatprep.subr.mxu0 0.0
        %1980 = vmatpush1.msra.mxu0 0.0
        %1981 = vmatprep.subr.mxu0 0.0
        %1982 = vmatpush1.msra.mxu0 0.0
        %1983 = vmatprep.subr.mxu0 0.0
        %1984 = vmatpush1.msra.mxu0 0.0
        %1985 = vmatprep.subr.mxu0 0.0
        %1986 = vmatpush1.msra.mxu0 0.0
        %1987 = vmatprep.subr.mxu0 0.0
        %1988 = vmatpush1.msra.mxu0 0.0
        %1989 = vmatprep.subr.mxu0 0.0
        %1990 = vmatpush1.msra.mxu0 0.0
        %1991 = vmatprep.subr.mxu0 0.0
        %1992 = vmatpush1.msra.mxu0 0.0
        %1993 = vmatprep.subr.mxu0 0.0
        %1994 = vmatpush1.msra.mxu0 0.0
        %1995 = vmatprep.subr.mxu0 0.0
        %1996 = vmatpush1.msra.mxu0 0.0
        %1997 = vmatprep.subr.mxu0 0.0
        %1998 = vmatpush1.msra.mxu0 0.0
        %1999 = vmatprep.subr.mxu0 0.0
        %2000 = vmatpush1.msra.mxu0 0.0
        %2001 = vmatprep.subr.mxu0 0.0
        %2002 = vmatpush1.msra.mxu0 0.0
        %2003 = vmatprep.subr.mxu0 0.0
        %2004 = vmatpush1.msra.mxu0 0.0
        %2005 = vmatprep.subr.mxu0 0.0
        %2006 = vmatpush1.msra.mxu0 0.0
        %2007 = vmatprep.subr.mxu0 0.0
        %2008 = vmatpush1.msra.mxu0 0.0
        %2009 = vmatprep.subr.mxu0 0.0
        %2010 = vmatpush1.msra.mxu0 0.0
        %2011 = vmatprep.subr.mxu0 0.0
        %2012 = vmatpush1.msra.mxu0 0.0
        %2013 = vmatprep.subr.mxu0 0.0
        %2014 = vmatpush1.msra.mxu0 0.0
        %2015 = vmatprep.subr.mxu0 0.0
        %2016 = vmatpush1.msra.mxu0 0.0
        %2017 = vmatprep.subr.mxu0 0.0
        %2018 = vmatpush1.msra.mxu0 0.0
        %2019 = vmatprep.subr.mxu0 0.0
        %2020 = vmatpush1.msra.mxu0 0.0
        %2021 = vmatprep.subr.mxu0 0.0
        %2022 = vmatpush1.msra.mxu0 0.0
        %2023 = vmatprep.subr.mxu0 0.0
        %2024 = vmatpush1.msra.mxu0 0.0
        %2025 = vmatprep.subr.mxu0 0.0
        %2026 = vmatpush1.msra.mxu0 0.0
        %2027 = vmatprep.subr.mxu0 0.0
        %2028 = vmatpush1.msra.mxu0 0.0
        %2029 = vmatprep.subr.mxu0 0.0
        %2030 = vmatpush1.msra.mxu0 0.0
        %2031 = vmatprep.subr.mxu0 0.0
        %2032 = vmatpush1.msra.mxu0 0.0
        %2033 = vmatprep.mubr.f32.mxu0 0.0
        %2034 = vmatmul.mubr.f32.gmra.mrb[0].mxu0 %v1967
        %v2035 = vpop.f32.mrb[0].mxu0
        %v2036 = vadd.f32 0.0, %v2035
        %v2037 = vpop.f32.mrb[0].mxu0
        %2038 = vdwg.mxu0
        %2039 = vrot.lane.b32.xlu0 %v545, 40
        %v2040 = vpop.permute.xlu0 %2039
        %v2043 = vsel %vm551, %v1962, 0
        %2045 = vmatprep.subr.mxu0 0.0
        %2046 = vmatpush1.msra.mxu0 %v2040
        %2047 = vmatprep.subr.mxu0 0.0
        %2048 = vmatpush1.msra.mxu0 0.0
        %2049 = vmatprep.subr.mxu0 0.0
        %2050 = vmatpush1.msra.mxu0 0.0
        %2051 = vmatprep.subr.mxu0 0.0
        %2052 = vmatpush1.msra.mxu0 0.0
        %2053 = vmatprep.subr.mxu0 0.0
        %2054 = vmatpush1.msra.mxu0 0.0
        %2055 = vmatprep.subr.mxu0 0.0
        %2056 = vmatpush1.msra.mxu0 0.0
        %2057 = vmatprep.subr.mxu0 0.0
        %2058 = vmatpush1.msra.mxu0 0.0
        %2059 = vmatprep.subr.mxu0 0.0
        %2060 = vmatpush1.msra.mxu0 0.0
        %2061 = vmatprep.subr.mxu0 0.0
        %2062 = vmatpush1.msra.mxu0 0.0
        %2063 = vmatprep.subr.mxu0 0.0
        %2064 = vmatpush1.msra.mxu0 0.0
        %2065 = vmatprep.subr.mxu0 0.0
        %2066 = vmatpush1.msra.mxu0 0.0
        %2067 = vmatprep.subr.mxu0 0.0
        %2068 = vmatpush1.msra.mxu0 0.0
        %2069 = vmatprep.subr.mxu0 0.0
        %2070 = vmatpush1.msra.mxu0 0.0
        %2071 = vmatprep.subr.mxu0 0.0
        %2072 = vmatpush1.msra.mxu0 0.0
        %2073 = vmatprep.subr.mxu0 0.0
        %2074 = vmatpush1.msra.mxu0 0.0
        %2075 = vmatprep.subr.mxu0 0.0
        %2076 = vmatpush1.msra.mxu0 0.0
        %2077 = vmatprep.subr.mxu0 0.0
        %2078 = vmatpush1.msra.mxu0 0.0
        %2079 = vmatprep.subr.mxu0 0.0
        %2080 = vmatpush1.msra.mxu0 0.0
        %2081 = vmatprep.subr.mxu0 0.0
        %2082 = vmatpush1.msra.mxu0 0.0
        %2083 = vmatprep.subr.mxu0 0.0
        %2084 = vmatpush1.msra.mxu0 0.0
        %2085 = vmatprep.subr.mxu0 0.0
        %2086 = vmatpush1.msra.mxu0 0.0
        %2087 = vmatprep.subr.mxu0 0.0
        %2088 = vmatpush1.msra.mxu0 0.0
        %2089 = vmatprep.subr.mxu0 0.0
        %2090 = vmatpush1.msra.mxu0 0.0
        %2091 = vmatprep.subr.mxu0 0.0
        %2092 = vmatpush1.msra.mxu0 0.0
        %2093 = vmatprep.subr.mxu0 0.0
        %2094 = vmatpush1.msra.mxu0 0.0
        %2095 = vmatprep.subr.mxu0 0.0
        %2096 = vmatpush1.msra.mxu0 0.0
        %2097 = vmatprep.subr.mxu0 0.0
        %2098 = vmatpush1.msra.mxu0 0.0
        %2099 = vmatprep.subr.mxu0 0.0
        %2100 = vmatpush1.msra.mxu0 0.0
        %2101 = vmatprep.subr.mxu0 0.0
        %2102 = vmatpush1.msra.mxu0 0.0
        %2103 = vmatprep.subr.mxu0 0.0
        %2104 = vmatpush1.msra.mxu0 0.0
        %2105 = vmatprep.subr.mxu0 0.0
        %2106 = vmatpush1.msra.mxu0 0.0
        %2107 = vmatprep.subr.mxu0 0.0
        %2108 = vmatpush1.msra.mxu0 0.0
        %2109 = vmatprep.mubr.f32.mxu0 0.0
        %2110 = vmatmul.mubr.f32.gmra.mrb[0].mxu0 %v2043
        %v2111 = vpop.f32.mrb[0].mxu0
        %v2112 = vadd.f32 0.0, %v2111
        %v2113 = vpop.f32.mrb[0].mxu0
        %2114 = vdwg.mxu0
        %v2115 = vld [vmem:[%s4 + $0x18] sm:$0xff]
        %v2117 = vsel %vm551, %v2036, 0
        %v2120 = vsel %vm551, %v2112, 0
        %2122 = vmatprep.subr.mxu0 0.0
        %2123 = vmatpush1.msra.mxu0 %v2115
        %2124 = vmatprep.subr.mxu0 0.0
        %2125 = vmatpush1.msra.mxu0 0.0
        %2126 = vmatprep.subr.mxu0 0.0
        %2127 = vmatpush1.msra.mxu0 0.0
        %2128 = vmatprep.subr.mxu0 0.0
        %2129 = vmatpush1.msra.mxu0 0.0
        %2130 = vmatprep.subr.mxu0 0.0
        %2131 = vmatpush1.msra.mxu0 0.0
        %2132 = vmatprep.subr.mxu0 0.0
        %2133 = vmatpush1.msra.mxu0 0.0
        %2134 = vmatprep.subr.mxu0 0.0
        %2135 = vmatpush1.msra.mxu0 0.0
        %2136 = vmatprep.subr.mxu0 0.0
        %2137 = vmatpush1.msra.mxu0 0.0
        %2138 = vmatprep.subr.mxu0 0.0
        %2139 = vmatpush1.msra.mxu0 0.0
        %2140 = vmatprep.subr.mxu0 0.0
        %2141 = vmatpush1.msra.mxu0 0.0
        %2142 = vmatprep.subr.mxu0 0.0
        %2143 = vmatpush1.msra.mxu0 0.0
        %2144 = vmatprep.subr.mxu0 0.0
        %2145 = vmatpush1.msra.mxu0 0.0
        %2146 = vmatprep.subr.mxu0 0.0
        %2147 = vmatpush1.msra.mxu0 0.0
        %2148 = vmatprep.subr.mxu0 0.0
        %2149 = vmatpush1.msra.mxu0 0.0
        %2150 = vmatprep.subr.mxu0 0.0
        %2151 = vmatpush1.msra.mxu0 0.0
        %2152 = vmatprep.subr.mxu0 0.0
        %2153 = vmatpush1.msra.mxu0 0.0
        %2154 = vmatprep.subr.mxu0 0.0
        %2155 = vmatpush1.msra.mxu0 0.0
        %2156 = vmatprep.subr.mxu0 0.0
        %2157 = vmatpush1.msra.mxu0 0.0
        %2158 = vmatprep.subr.mxu0 0.0
        %2159 = vmatpush1.msra.mxu0 0.0
        %2160 = vmatprep.subr.mxu0 0.0
        %2161 = vmatpush1.msra.mxu0 0.0
        %2162 = vmatprep.subr.mxu0 0.0
        %2163 = vmatpush1.msra.mxu0 0.0
        %2164 = vmatprep.subr.mxu0 0.0
        %2165 = vmatpush1.msra.mxu0 0.0
        %2166 = vmatprep.subr.mxu0 0.0
        %2167 = vmatpush1.msra.mxu0 0.0
        %2168 = vmatprep.subr.mxu0 0.0
        %2169 = vmatpush1.msra.mxu0 0.0
        %2170 = vmatprep.subr.mxu0 0.0
        %2171 = vmatpush1.msra.mxu0 0.0
        %2172 = vmatprep.subr.mxu0 0.0
        %2173 = vmatpush1.msra.mxu0 0.0
        %2174 = vmatprep.subr.mxu0 0.0
        %2175 = vmatpush1.msra.mxu0 0.0
        %2176 = vmatprep.subr.mxu0 0.0
        %2177 = vmatpush1.msra.mxu0 0.0
        %2178 = vmatprep.subr.mxu0 0.0
        %2179 = vmatpush1.msra.mxu0 0.0
        %2180 = vmatprep.subr.mxu0 0.0
        %2181 = vmatpush1.msra.mxu0 0.0
        %2182 = vmatprep.subr.mxu0 0.0
        %2183 = vmatpush1.msra.mxu0 0.0
        %2184 = vmatprep.subr.mxu0 0.0
        %2185 = vmatpush1.msra.mxu0 0.0
        %2186 = vmatprep.mubr.f32.mxu0 0.0
        %2187 = vmatmul.mubr.f32.gmra.mrb[0].mxu0 %v2117
        %v2188 = vpop.f32.mrb[0].mxu0
        %v2189 = vadd.f32 0.0, %v2188
        %v2190 = vpop.f32.mrb[0].mxu0
        %2191 = vmatprep.mubr.f32.mxu0 0.0
        %2192 = vmatmul.mubr.f32.gmra.mrb[0].mxu0 %v2120
        %v2193 = vpop.f32.mrb[0].mxu0
        %v2194 = vadd.f32 0.0, %v2193
        %v2195 = vpop.f32.mrb[0].mxu0
        %2196 = vdwg.mxu0
        %v2197 = vadd.f32 %v1783, %v2189
        %v2198 = vadd.f32 %v1784, %v2194
        %v2199 = vadd.f32 %v415, %v2197
        %v2200 = vadd.f32 %v416, %v2198
        %v2201 = vld [vmem:[%s5] sm:$0x1]
        %v2203 = vlaneseq
        %v2204 = vshrl.u32 %v2203, 7
        %v2205 = vsub.s32 0, %v2204
        %v2206 = vrot.slane %v2201, %v2205
        %v2208 = vadd.f32 %v2199, %v2206
        %v2209 = vadd.f32 %v2200, %v2206
        %v2210 = vsel %vm417, %v2208, 0.0
        %2211 = vadd.xlane.f32.xlu0 %v2210
        %v2212 = vpop.xlane.xlu0 %2211
        %v2213 = vsel %vm417, %v2209, 0.0
        %2214 = vadd.xlane.f32.xlu0 %v2213
        %v2215 = vpop.xlane.xlu0 %2214
        %v2216 = vmul.f32 %v2212, %v424
        %v2217 = vmul.f32 %v2215, %v424
        %v2218 = vsub.f32 %v2208, %v2216
        %v2219 = vsub.f32 %v2209, %v2217
        %v2220 = vmul.f32 %v2218, %v2218
        %v2221 = vmul.f32 %v2219, %v2219
        %v2222 = vsel %vm417, %v2220, 0.0
        %2223 = vadd.xlane.f32.xlu0 %v2222
        %v2224 = vpop.xlane.xlu0 %2223
        %v2225 = vsel %vm417, %v2221, 0.0
        %2226 = vadd.xlane.f32.xlu0 %v2225
        %v2227 = vpop.xlane.xlu0 %2226
        %v2228 = vmul.f32 %v2224, %v424
        %v2229 = vmul.f32 %v2227, %v424
        %v2230 = vadd.f32 %v2228, 1e-05
        %v2231 = vadd.f32 %v2229, 1e-05
        %v2232 = vrsqrt.pop %v2230
        %v2233 = vrsqrt.pop %v2231
        %v2234 = vmul.f32 %v2218, %v2232
        %v2235 = vmul.f32 %v2219, %v2233
        %v2236 = vld [vmem:[%s6] sm:$0x1]
        %v2238 = vlaneseq
        %v2239 = vshrl.u32 %v2238, 7
        %v2240 = vsub.s32 0, %v2239
        %v2241 = vrot.slane %v2236, %v2240
        %v2243 = vmul.f32 %v2234, %v2241
        %v2244 = vmul.f32 %v2235, %v2241
        %v2245 = vld [vmem:[%s7] sm:$0x1]
        %v2247 = vlaneseq
        %v2248 = vshrl.u32 %v2247, 7
        %v2249 = vsub.s32 0, %v2248
        %v2250 = vrot.slane %v2245, %v2249
        %v2252 = vadd.f32 %v2243, %v2250
        %v2253 = vadd.f32 %v2244, %v2250
        %v2254 = vld [vmem:[%s8] sm:$0xff]
        %v2255 = vld [vmem:[%s8 + $0x8] sm:$0xff]
        %v2256 = vld [vmem:[%s8 + $0x10] sm:$0xff]
        %v2257 = vld [vmem:[%s8 + $0x18] sm:$0xff]
        %v2258 = vld [vmem:[%s9] sm:$0x1]
        %v2260 = vlaneseq
        %v2261 = vshrl.u32 %v2260, 7
        %v2262 = vsub.s32 0, %v2261
        %v2263 = vrot.slane %v2258, %v2262
        %v2266 = vsel %vm417, %v2252, 0
        %v2269 = vsel %vm417, %v2253, 0
        %2271 = vmatprep.subr.mxu0 0.0
        %2272 = vmatpush1.msra.mxu0 %v2254
        %2273 = vmatprep.subr.mxu0 0.0
        %2274 = vmatpush1.msra.mxu0 %v2255
        %2275 = vmatprep.subr.mxu0 0.0
        %2276 = vmatpush1.msra.mxu0 %v2256
        %2277 = vmatprep.subr.mxu0 0.0
        %2278 = vmatpush1.msra.mxu0 %v2257
        %2279 = vmatprep.subr.mxu0 0.0
        %2280 = vmatpush1.msra.mxu0 0.0
        %2281 = vmatprep.subr.mxu0 0.0
        %2282 = vmatpush1.msra.mxu0 0.0
        %2283 = vmatprep.subr.mxu0 0.0
        %2284 = vmatpush1.msra.mxu0 0.0
        %2285 = vmatprep.subr.mxu0 0.0
        %2286 = vmatpush1.msra.mxu0 0.0
        %2287 = vmatprep.subr.mxu0 0.0
        %2288 = vmatpush1.msra.mxu0 0.0
        %2289 = vmatprep.subr.mxu0 0.0
        %2290 = vmatpush1.msra.mxu0 0.0
        %2291 = vmatprep.subr.mxu0 0.0
        %2292 = vmatpush1.msra.mxu0 0.0
        %2293 = vmatprep.subr.mxu0 0.0
        %2294 = vmatpush1.msra.mxu0 0.0
        %2295 = vmatprep.subr.mxu0 0.0
        %2296 = vmatpush1.msra.mxu0 0.0
        %2297 = vmatprep.subr.mxu0 0.0
        %2298 = vmatpush1.msra.mxu0 0.0
        %2299 = vmatprep.subr.mxu0 0.0
        %2300 = vmatpush1.msra.mxu0 0.0
        %2301 = vmatprep.subr.mxu0 0.0
        %2302 = vmatpush1.msra.mxu0 0.0
        %2303 = vmatprep.subr.mxu0 0.0
        %2304 = vmatpush1.msra.mxu0 0.0
        %2305 = vmatprep.subr.mxu0 0.0
        %2306 = vmatpush1.msra.mxu0 0.0
        %2307 = vmatprep.subr.mxu0 0.0
        %2308 = vmatpush1.msra.mxu0 0.0
        %2309 = vmatprep.subr.mxu0 0.0
        %2310 = vmatpush1.msra.mxu0 0.0
        %2311 = vmatprep.subr.mxu0 0.0
        %2312 = vmatpush1.msra.mxu0 0.0
        %2313 = vmatprep.subr.mxu0 0.0
        %2314 = vmatpush1.msra.mxu0 0.0
        %2315 = vmatprep.subr.mxu0 0.0
        %2316 = vmatpush1.msra.mxu0 0.0
        %2317 = vmatprep.subr.mxu0 0.0
        %2318 = vmatpush1.msra.mxu0 0.0
        %2319 = vmatprep.subr.mxu0 0.0
        %2320 = vmatpush1.msra.mxu0 0.0
        %2321 = vmatprep.subr.mxu0 0.0
        %2322 = vmatpush1.msra.mxu0 0.0
        %2323 = vmatprep.subr.mxu0 0.0
        %2324 = vmatpush1.msra.mxu0 0.0
        %2325 = vmatprep.subr.mxu0 0.0
        %2326 = vmatpush1.msra.mxu0 0.0
        %2327 = vmatprep.subr.mxu0 0.0
        %2328 = vmatpush1.msra.mxu0 0.0
        %2329 = vmatprep.subr.mxu0 0.0
        %2330 = vmatpush1.msra.mxu0 0.0
        %2331 = vmatprep.subr.mxu0 0.0
        %2332 = vmatpush1.msra.mxu0 0.0
        %2333 = vmatprep.subr.mxu0 0.0
        %2334 = vmatpush1.msra.mxu0 0.0
        %2335 = vmatprep.mubr.f32.mxu0 0.0
        %2336 = vmatmul.mubr.f32.gmra.mrb[0].mxu0 %v2266
        %v2337 = vpop.f32.mrb[0].mxu0
        %v2338 = vadd.f32 %v2263, %v2337
        %v2339 = vpop.f32.mrb[0].mxu0
        %2340 = vmatprep.mubr.f32.mxu0 0.0
        %2341 = vmatmul.mubr.f32.gmra.mrb[0].mxu0 %v2269
        %v2342 = vpop.f32.mrb[0].mxu0
        %v2343 = vadd.f32 %v2263, %v2342
        %v2344 = vpop.f32.mrb[0].mxu0
        %2345 = vdwg.mxu0
        %v2346 = vmul.f32 %v2338, 0.5
        %v2347 = vmul.f32 %v2343, 0.5
        %v2348 = vmul.f32 %v2338, 0.70710677
        %v2349 = vmul.f32 %v2343, 0.70710677
        %v2350 = verf.f32.pop %v2348
        %v2351 = verf.f32.pop %v2349
        %v2352 = vadd.f32 %v2350, 1.0
        %v2353 = vadd.f32 %v2351, 1.0
        %v2354 = vmul.f32 %v2346, %v2352
        %v2355 = vmul.f32 %v2347, %v2353
        %v2356 = vld [vmem:[%s10] sm:$0xff]
        %v2357 = vld [vmem:[%s10 + $0x8] sm:$0xff]
        %v2358 = vld [vmem:[%s10 + $0x10] sm:$0xff]
        %v2359 = vld [vmem:[%s10 + $0x18] sm:$0xff]
        %v2360 = vld [vmem:[%s10 + $0x20] sm:$0xff]
        %v2361 = vld [vmem:[%s10 + $0x28] sm:$0xff]
        %v2362 = vld [vmem:[%s10 + $0x30] sm:$0xff]
        %v2363 = vld [vmem:[%s10 + $0x38] sm:$0xff]
        %v2364 = vld [vmem:[%s10 + $0x40] sm:$0xff]
        %v2365 = vld [vmem:[%s10 + $0x48] sm:$0xff]
        %v2366 = vld [vmem:[%s10 + $0x50] sm:$0xff]
        %v2367 = vld [vmem:[%s10 + $0x58] sm:$0xff]
        %v2368 = vld [vmem:[%s10 + $0x60] sm:$0xff]
        %v2369 = vld [vmem:[%s10 + $0x68] sm:$0xff]
        %v2370 = vld [vmem:[%s10 + $0x70] sm:$0xff]
        %v2371 = vld [vmem:[%s10 + $0x78] sm:$0xff]
        %v2372 = vld [vmem:[%s11] sm:$0x1]
        %v2374 = vlaneseq
        %v2375 = vshrl.u32 %v2374, 7
        %v2376 = vsub.s32 0, %v2375
        %v2377 = vrot.slane %v2372, %v2376
        %2379 = vmatprep.subr.mxu0 0.0
        %2380 = vmatpush1.msra.mxu0 %v2356
        %2381 = vmatprep.subr.mxu0 0.0
        %2382 = vmatpush1.msra.mxu0 %v2357
        %2383 = vmatprep.subr.mxu0 0.0
        %2384 = vmatpush1.msra.mxu0 %v2358
        %2385 = vmatprep.subr.mxu0 0.0
        %2386 = vmatpush1.msra.mxu0 %v2359
        %2387 = vmatprep.subr.mxu0 0.0
        %2388 = vmatpush1.msra.mxu0 %v2360
        %2389 = vmatprep.subr.mxu0 0.0
        %2390 = vmatpush1.msra.mxu0 %v2361
        %2391 = vmatprep.subr.mxu0 0.0
        %2392 = vmatpush1.msra.mxu0 %v2362
        %2393 = vmatprep.subr.mxu0 0.0
        %2394 = vmatpush1.msra.mxu0 %v2363
        %2395 = vmatprep.subr.mxu0 0.0
        %2396 = vmatpush1.msra.mxu0 %v2364
        %2397 = vmatprep.subr.mxu0 0.0
        %2398 = vmatpush1.msra.mxu0 %v2365
        %2399 = vmatprep.subr.mxu0 0.0
        %2400 = vmatpush1.msra.mxu0 %v2366
        %2401 = vmatprep.subr.mxu0 0.0
        %2402 = vmatpush1.msra.mxu0 %v2367
        %2403 = vmatprep.subr.mxu0 0.0
        %2404 = vmatpush1.msra.mxu0 %v2368
        %2405 = vmatprep.subr.mxu0 0.0
        %2406 = vmatpush1.msra.mxu0 %v2369
        %2407 = vmatprep.subr.mxu0 0.0
        %2408 = vmatpush1.msra.mxu0 %v2370
        %2409 = vmatprep.subr.mxu0 0.0
        %2410 = vmatpush1.msra.mxu0 %v2371
        %2411 = vmatprep.subr.mxu0 0.0
        %2412 = vmatpush1.msra.mxu0 0.0
        %2413 = vmatprep.subr.mxu0 0.0
        %2414 = vmatpush1.msra.mxu0 0.0
        %2415 = vmatprep.subr.mxu0 0.0
        %2416 = vmatpush1.msra.mxu0 0.0
        %2417 = vmatprep.subr.mxu0 0.0
        %2418 = vmatpush1.msra.mxu0 0.0
        %2419 = vmatprep.subr.mxu0 0.0
        %2420 = vmatpush1.msra.mxu0 0.0
        %2421 = vmatprep.subr.mxu0 0.0
        %2422 = vmatpush1.msra.mxu0 0.0
        %2423 = vmatprep.subr.mxu0 0.0
        %2424 = vmatpush1.msra.mxu0 0.0
        %2425 = vmatprep.subr.mxu0 0.0
        %2426 = vmatpush1.msra.mxu0 0.0
        %2427 = vmatprep.subr.mxu0 0.0
        %2428 = vmatpush1.msra.mxu0 0.0
        %2429 = vmatprep.subr.mxu0 0.0
        %2430 = vmatpush1.msra.mxu0 0.0
        %2431 = vmatprep.subr.mxu0 0.0
        %2432 = vmatpush1.msra.mxu0 0.0
        %2433 = vmatprep.subr.mxu0 0.0
        %2434 = vmatpush1.msra.mxu0 0.0
        %2435 = vmatprep.subr.mxu0 0.0
        %2436 = vmatpush1.msra.mxu0 0.0
        %2437 = vmatprep.subr.mxu0 0.0
        %2438 = vmatpush1.msra.mxu0 0.0
        %2439 = vmatprep.subr.mxu0 0.0
        %2440 = vmatpush1.msra.mxu0 0.0
        %2441 = vmatprep.subr.mxu0 0.0
        %2442 = vmatpush1.msra.mxu0 0.0
        %2443 = vmatprep.mubr.f32.mxu0 0.0
        %2444 = vmatmul.mubr.f32.gmra.mrb[0].mxu0 %v2354
        %v2445 = vpop.f32.mrb[0].mxu0
        %v2446 = vadd.f32 %v2377, %v2445
        %v2447 = vpop.f32.mrb[0].mxu0
        %2448 = vmatprep.mubr.f32.mxu0 0.0
        %2449 = vmatmul.mubr.f32.gmra.mrb[0].mxu0 %v2355
        %v2450 = vpop.f32.mrb[0].mxu0
        %v2451 = vadd.f32 %v2377, %v2450
        %v2452 = vpop.f32.mrb[0].mxu0
        %2453 = vdwg.mxu0
        %v2454 = vadd.f32 %v2208, %v2446
        %v2455 = vadd.f32 %v2209, %v2451
        %2456 = vst.msk [vmem:[%s407] sm:$0xff] %vm417, %v2454
        %2457 = vst.msk [vmem:[%s407 + $0x8] sm:$0xff] %vm417, %v2455
        %s2458 = sand.u32 %s291, 1
        %s2459 = scalar_lea.sflag [#allocation3], %s2458
        %s2460 = sand.u32 %s291, 1
        %s2461 = smul.addr %s2460, 16
        %s2462 = scalar_lea.vmem [#allocation2], %s2461
        // Predicated region
        $region69: #{tpu_custom_call.1} parent=67 // pred_check
          %p2463 = pneg %p301
        $region70: #{tpu_custom_call.1} parent=67 // pred_check_branch
          %2465 = sbr.rel (%p2463) target = $region72
        $region71: #{tpu_custom_call.1} parent=67 // pred_region
          %s2466 = smul.u32 2, %s26
          %s2468 = ssub.s32 256, 256
          %2469 = vsyncadd %s2459, %s2468
          %s2470 = smul.addr %s2466, 128
          %s2471 = scalar_lea.hbm %s12, %s2470
          %s2472 = sshll.u32 %s2462, 4
          %s2473 = int_to_ptr.vmem [resolvable:$true] %s2472
          %2478 = dma.vmem_to_hbm [thread:$0]  %s2473, 256, %s2471, %s2459, 128, 128, 8
        $region72: #{tpu_custom_call.1} parent=67 // pred_fallthru
          _
      $region68: #{tpu_custom_call.1} parent=5 // pred_fallthru
        _
      %p2479 = scmp.le.s32.totalorder 2, %s21
      // Predicated region
      $region73: #{tpu_custom_call.1} parent=5 // pred_check
        %p2480 = pneg %p2479
      $region74: #{tpu_custom_call.1} parent=5 // pred_check_branch
        %2482 = sbr.rel (%p2480) target = $region76
      $region75: #{tpu_custom_call.1} parent=5 // pred_region
        %s2483 = ssub.s32 %s21, 2
        // Predicated region
        $region77: #{tpu_custom_call.1} parent=75 // pred_check
          %p2484 = pneg %p307
        $region78: #{tpu_custom_call.1} parent=75 // pred_check_branch
          %2486 = sbr.rel (%p2484) target = $region80
        $region79: #{tpu_custom_call.1} parent=75 // pred_region
          %s2487 = sand.u32 %s292, 1
          %s2488 = scalar_lea.sflag [#allocation3], %s2487
          %s2489 = sand.u32 %s292, 1
          %s2490 = smul.addr %s2489, 16
          %s2491 = scalar_lea.vmem [#allocation2], %s2490
          %2492 = dma.done %s2488, 256
        $region80: #{tpu_custom_call.1} parent=75 // pred_fallthru
          _
      $region76: #{tpu_custom_call.1} parent=5 // pred_fallthru
        _
    $region6: #{tpu_custom_call.1} parent=1 // loop_footer
      %s25 = sadd.s32 1, %s21
    $region7: #{tpu_custom_call.1} parent=1 // loop_footer_branch
      %20 = sbr.rel target = $region3
    $region8: #{tpu_custom_call.1} parent=1 // loop_exit
      _
    %2493 = vsyncpa [#allocation3], 1
    %s2494 = scalar_lea.sflag [#allocation3], 1
    %2495 = vsyncpa %s2494, 1

</llo_original>
